<compile_context>
chip_gen: v6e
topology: v6e:2x2x1
jax: 0.10.0
libtpu: 0.0.40
codegen_flags: <defaults>
</compile_context>

<pallas_src>
import functools
import random
import string

import numpy as np
import jax
import jax.numpy as jnp
from jax import lax
from jax.experimental import pallas as pl
from jax.experimental.pallas import tpu as pltpu

PRINTABLEDICT = {v: i for i, v in enumerate(string.printable)}


def _lstm_tagger_kernel(sent_ref, xg_tab_ref, whh_ref, wout_ref, bout_ref,
                        out_ref, xg_vmem, dma_sems, *, seq_len, hidden_dim):
    """One sentence (one grid step): row-gather of the folded gate table,
    unrolled LSTM recurrence, tag projection, log_softmax."""
    T, H = seq_len, hidden_dim
    b = pl.program_id(0)

    # ---- Gather only the T needed rows of the (vocab, 4H) folded gate table
    # from HBM into VMEM (one small DMA per token; starts then waits so the
    # copies overlap).  Sentence ids were scalar-prefetched into SMEM. ----
    for t in range(T):
        pltpu.make_async_copy(
            xg_tab_ref.at[pl.ds(sent_ref[b, t], 1), :],
            xg_vmem.at[pl.ds(t, 1), :],
            dma_sems.at[t]).start()
    for t in range(T):
        pltpu.make_async_copy(
            xg_tab_ref.at[pl.ds(0, 1), :],
            xg_vmem.at[pl.ds(t, 1), :],
            dma_sems.at[t]).wait()

    xg = xg_vmem[...]          # (T, 4H): x_t @ W_ih + b, g-columns pre-doubled
    whh = whh_ref[...]         # hoisted: loaded once, g-columns pre-doubled

    # ---- Recurrence, fully unrolled (T static): straight-line code gives the
    # scheduler cross-timestep MXU/EUP overlap; one sigmoid pass per step. ----
    h = jnp.zeros((1, H), jnp.float32)
    c = jnp.zeros((1, H), jnp.float32)
    h_list = []
    for t in range(T):
        gates = xg[t:t + 1, :] + jnp.dot(h, whh,
                                         preferred_element_type=jnp.float32)
        sg = jax.nn.sigmoid(gates)            # single full-width (1, 4H) EUP pass
        i_g = sg[:, 0 * H:1 * H]
        f_g = sg[:, 1 * H:2 * H]
        g_g = 2.0 * sg[:, 2 * H:3 * H] - 1.0  # tanh(x) = 2*sigmoid(2x) - 1
        o_g = sg[:, 3 * H:4 * H]
        c = f_g * c + i_g * g_g
        h = o_g * jnp.tanh(c)
        h_list.append(h)
    hs = jnp.concatenate(h_list, axis=0)      # (T, H), single concat after loop

    # ---- hidden2tag + log_softmax (tag dim padded to 128 lanes). ----
    logits = (jnp.dot(hs, wout_ref[...], preferred_element_type=jnp.float32)
              + bout_ref[...])                # pad columns carry bias = -1e30
    m = jnp.max(logits, axis=1, keepdims=True)
    z = logits - m
    lse = jnp.log(jnp.sum(jnp.exp(z), axis=1, keepdims=True))
    out_ref[...] = z - lse                    # (T, 128): lane-dense, unmasked vst


def fold_params(params, hidden_dim, tagset_size):
    """Host-side one-time fold of embedding/semiChara/W_ih into a (vocab, 4H)
    gate table, plus the tanh<->sigmoid g-gate pre-scaling and the lane-padded
    tag projection.  All folds are exact (compositions of linear ops)."""
    H = hidden_dim
    VPAD = 128 * pl.cdiv(tagset_size, 128)

    x_all = jnp.concatenate([params["emb"], params["semi"]], axis=1)   # (V, E+300)
    xg_table = x_all @ params["wih"] + params["b"]                     # (V, 4H)
    xg_table = xg_table.at[:, 2 * H:3 * H].multiply(2.0)               # g-gate *2
    whh2 = params["whh"].at[:, 2 * H:3 * H].multiply(2.0)              # g-gate *2

    wout_p = jnp.zeros((H, VPAD), jnp.float32).at[:, :tagset_size].set(
        params["w_out"])
    bout_p = jnp.full((1, VPAD), -1e30, jnp.float32).at[:, :tagset_size].set(
        params["b_out"])
    return {"xg_table": xg_table, "whh": whh2, "wout": wout_p,
            "bout": bout_p, "tagset": tagset_size}


def lstm_tagger_forward(sentences, folded, hidden_dim):
    """sentences: (B, T) int32 token ids.  Returns (B, T, tagset) log-probs
    (each row identical to the single-sentence module forward)."""
    B, T = sentences.shape
    H = hidden_dim
    VPAD = folded["wout"].shape[1]

    kernel = functools.partial(_lstm_tagger_kernel, seq_len=T, hidden_dim=H)

    grid_spec = pltpu.PrefetchScalarGridSpec(
        num_scalar_prefetch=1,               # sentence ids -> SMEM
        grid=(B,),
        in_specs=[
            pl.BlockSpec(memory_space=pl.ANY),                      # xg_table (HBM)
            pl.BlockSpec((H, 4 * H), lambda b, sent: (0, 0)),       # W_hh
            pl.BlockSpec((H, VPAD), lambda b, sent: (0, 0)),        # hidden2tag
            pl.BlockSpec((1, VPAD), lambda b, sent: (0, 0)),        # bias (padded)
        ],
        out_specs=pl.BlockSpec((None, T, VPAD), lambda b, sent: (b, 0, 0)),
        scratch_shapes=[
            pltpu.VMEM((T, 4 * H), jnp.float32),                    # gathered xg rows
            pltpu.SemaphoreType.DMA((T,)),
        ],
    )

    out = pl.pallas_call(
        kernel,
        out_shape=jax.ShapeDtypeStruct((B, T, VPAD), jnp.float32),
        grid_spec=grid_spec,
        compiler_params=pltpu.CompilerParams(
            dimension_semantics=("parallel",)),   # batch axis across cores (v7x)
    )(sentences.astype(jnp.int32), folded["xg_table"], folded["whh"],
      folded["wout"], folded["bout"])
    return out[:, :, :folded["tagset"]]


# TODO(synk): semiChara's per-word Python string processing has no Pallas
# equivalent; it is precomputed on host into a (vocab, 300) table (exactly the
# torch code's vectors) and then folded with the embedding into xg_table.
def build_semichara_table(idx_to_word):
    vocab = len(idx_to_word)
    table = np.zeros((vocab, 300), dtype=np.float32)
    for i, word in enumerate(idx_to_word):
        table[i, PRINTABLEDICT[word[0]]] = 1.0
        for j in range(1, len(word) - 1):
            table[i, 100 + PRINTABLEDICT[word[j]]] += 1.0
        table[i, 200 + PRINTABLEDICT[word[len(word) - 1]]] = 1.0
    return jnp.asarray(table)


def _reference(sentence_ids, params, H):
    """Pure-JAX reference with PyTorch LSTM semantics (single sentence)."""
    embeds = params["emb"][sentence_ids]
    semivec = params["semi"][sentence_ids]
    x = jnp.concatenate([embeds, semivec], axis=1)
    xg = x @ params["wih"] + params["b"]

    def step(carry, g_row):
        h, c = carry
        gates = g_row[None, :] + h @ params["whh"]
        i = jax.nn.sigmoid(gates[:, 0 * H:1 * H])
        f = jax.nn.sigmoid(gates[:, 1 * H:2 * H])
        g = jnp.tanh(gates[:, 2 * H:3 * H])
        o = jax.nn.sigmoid(gates[:, 3 * H:4 * H])
        c = f * c + i * g
        h = o * jnp.tanh(c)
        return (h, c), h[0]

    init = (jnp.zeros((1, H), jnp.float32), jnp.zeros((1, H), jnp.float32))
    _, hs = lax.scan(step, init, xg)
    logits = hs @ params["w_out"] + params["b_out"]
    return jax.nn.log_softmax(logits, axis=1)


def make_params(key, idx_to_word, embedding_dim, hidden_dim, tagset_size):
    """Synthetic parameters matching nn.Embedding / nn.LSTM / nn.Linear shapes
    (weights stored transposed: (in_features, out_features))."""
    vocab = len(idx_to_word)
    E, H, V = embedding_dim, hidden_dim, tagset_size
    D = E + 300
    ks = jax.random.split(key, 7)
    k_lstm = 1.0 / jnp.sqrt(jnp.float32(H))
    k_lin = 1.0 / jnp.sqrt(jnp.float32(H))

    def u(k, shape, bound):
        return jax.random.uniform(k, shape, jnp.float32, -bound, bound)

    return {
        "emb": jax.random.normal(ks[0], (vocab, E), jnp.float32),
        "semi": build_semichara_table(idx_to_word),
        "wih": u(ks[1], (D, 4 * H), k_lstm),            # W_ih^T
        "whh": u(ks[2], (H, 4 * H), k_lstm),            # W_hh^T
        "b": u(ks[3], (1, 4 * H), k_lstm) + u(ks[4], (1, 4 * H), k_lstm),
        "w_out": u(ks[5], (H, V), k_lin),               # hidden2tag^T
        "b_out": u(ks[6], (1, V), k_lin),
    }


if __name__ == "__main__":
    BATCH, SEQ_LEN = 2, 8
    EMBED_DIM, HIDDEN_DIM, TAGSET_SIZE, WORD_VOCAB = 32, 32, 10, 24

    # Deterministic tiny word vocabulary (idx_to_word) for the semiChara table.
    rng = random.Random(1)
    idx_to_word = ["".join(rng.choice(string.ascii_lowercase)
                           for _ in range(rng.randint(2, 8)))
                   for _ in range(WORD_VOCAB)]

    root = jax.random.PRNGKey(0)
    k_param, k_sent = jax.random.split(root)
    params = make_params(k_param, idx_to_word, EMBED_DIM, HIDDEN_DIM,
                         TAGSET_SIZE)
    sentences = jax.random.randint(k_sent, (BATCH, SEQ_LEN), 0, WORD_VOCAB,
                                   jnp.int32)

    folded = fold_params(params, HIDDEN_DIM, TAGSET_SIZE)
    out = jax.block_until_ready(
        lstm_tagger_forward(sentences, folded, HIDDEN_DIM))
    ref = jnp.stack([_reference(sentences[b], params, HIDDEN_DIM)
                     for b in range(BATCH)])

    assert out.shape == (BATCH, SEQ_LEN, TAGSET_SIZE)
    assert jnp.allclose(out, ref, atol=1e-4, rtol=1e-4), (
        f"max abs err {jnp.max(jnp.abs(out - ref))}")
    print("KERNEL_OK")
</pallas_src>

<mosaic_0001>
module attributes {stable_mosaic.version = 11 : i64} {
  func.func @_lstm_tagger_kernel(%arg0: i32, %arg1: memref<2x8xi32, #tpu.memory_space<smem>>, %arg2: memref<24x128xf32, #tpu.memory_space<any>>, %arg3: memref<32x128xf32, #tpu.memory_space<vmem>>, %arg4: memref<32x128xf32, #tpu.memory_space<vmem>>, %arg5: memref<1x128xf32, #tpu.memory_space<vmem>>, %arg6: memref<1x8x128xf32, #tpu.memory_space<vmem>>, %arg7: memref<8x128xf32, #tpu.memory_space<vmem>>, %arg8: memref<8x!tpu.dma_semaphore, #tpu.memory_space<semaphore_mem>>) attributes {dimension_semantics = [#tpu.dimension_semantics<parallel>], iteration_bounds = array<i64: 2>, scalar_prefetch = 1 : i64, scratch_operands = 2 : i64, tpu.core_type = #tpu.core_type<tc>, window_params = [{}, {pipeline_mode = #tpu.pipeline_mode<synchronous>, transform_indices = @transform_1, window_bounds = array<i64: 32, 128>}, {pipeline_mode = #tpu.pipeline_mode<synchronous>, transform_indices = @transform_2, window_bounds = array<i64: 32, 128>}, {pipeline_mode = #tpu.pipeline_mode<synchronous>, transform_indices = @transform_3, window_bounds = array<i64: 1, 128>}, {transform_indices = @transform_4, window_bounds = array<i64: 1, 8, 128>}]} {
    %0 = arith.index_cast %arg0 : i32 to index
    %c0 = arith.constant 0 : index
    %1 = memref.load %arg1[%0, %c0] : memref<2x8xi32, #tpu.memory_space<smem>>
    %c0_i32 = arith.constant 0 : i32
    %c0_i32_0 = arith.constant 0 : i32
    %2 = tpu.memref_slice %arg2[%1, %c0_i32_0] : memref<24x128xf32, #tpu.memory_space<any>> -> memref<1x128xf32, #tpu.memory_space<any>>
    %c0_i32_1 = arith.constant 0 : i32
    %c0_i32_2 = arith.constant 0 : i32
    %3 = tpu.memref_slice %arg7[%c0_i32_1, %c0_i32_2] : memref<8x128xf32, #tpu.memory_space<vmem>> -> memref<1x128xf32, #tpu.memory_space<vmem>>
    %4 = tpu.memref_slice %arg8[%c0_i32] : memref<8x!tpu.dma_semaphore, #tpu.memory_space<semaphore_mem>> -> memref<1x!tpu.dma_semaphore, #tpu.memory_space<semaphore_mem>>
    %5 = tpu.memref_squeeze %4 : memref<1x!tpu.dma_semaphore, #tpu.memory_space<semaphore_mem>> -> memref<!tpu.dma_semaphore, #tpu.memory_space<semaphore_mem>>
    tpu.enqueue_dma source(%2 : memref<1x128xf32, #tpu.memory_space<any>>) target(%3 : memref<1x128xf32, #tpu.memory_space<vmem>>) target_semaphore(%5 : memref<!tpu.dma_semaphore, #tpu.memory_space<semaphore_mem>>)
    %6 = arith.index_cast %arg0 : i32 to index
    %c1 = arith.constant 1 : index
    %7 = memref.load %arg1[%6, %c1] : memref<2x8xi32, #tpu.memory_space<smem>>
    %c1_i32 = arith.constant 1 : i32
    %c0_i32_3 = arith.constant 0 : i32
    %8 = tpu.memref_slice %arg2[%7, %c0_i32_3] : memref<24x128xf32, #tpu.memory_space<any>> -> memref<1x128xf32, #tpu.memory_space<any>>
    %c1_i32_4 = arith.constant 1 : i32
    %c0_i32_5 = arith.constant 0 : i32
    %9 = tpu.memref_slice %arg7[%c1_i32_4, %c0_i32_5] : memref<8x128xf32, #tpu.memory_space<vmem>> -> memref<1x128xf32, #tpu.memory_space<vmem>>
    %10 = tpu.memref_slice %arg8[%c1_i32] : memref<8x!tpu.dma_semaphore, #tpu.memory_space<semaphore_mem>> -> memref<1x!tpu.dma_semaphore, #tpu.memory_space<semaphore_mem>>
    %11 = tpu.memref_squeeze %10 : memref<1x!tpu.dma_semaphore, #tpu.memory_space<semaphore_mem>> -> memref<!tpu.dma_semaphore, #tpu.memory_space<semaphore_mem>>
    tpu.enqueue_dma source(%8 : memref<1x128xf32, #tpu.memory_space<any>>) target(%9 : memref<1x128xf32, #tpu.memory_space<vmem>>) target_semaphore(%11 : memref<!tpu.dma_semaphore, #tpu.memory_space<semaphore_mem>>)
    %12 = arith.index_cast %arg0 : i32 to index
    %c2 = arith.constant 2 : index
    %13 = memref.load %arg1[%12, %c2] : memref<2x8xi32, #tpu.memory_space<smem>>
    %c2_i32 = arith.constant 2 : i32
    %c0_i32_6 = arith.constant 0 : i32
    %14 = tpu.memref_slice %arg2[%13, %c0_i32_6] : memref<24x128xf32, #tpu.memory_space<any>> -> memref<1x128xf32, #tpu.memory_space<any>>
    %c2_i32_7 = arith.constant 2 : i32
    %c0_i32_8 = arith.constant 0 : i32
    %15 = tpu.memref_slice %arg7[%c2_i32_7, %c0_i32_8] : memref<8x128xf32, #tpu.memory_space<vmem>> -> memref<1x128xf32, #tpu.memory_space<vmem>>
    %16 = tpu.memref_slice %arg8[%c2_i32] : memref<8x!tpu.dma_semaphore, #tpu.memory_space<semaphore_mem>> -> memref<1x!tpu.dma_semaphore, #tpu.memory_space<semaphore_mem>>
    %17 = tpu.memref_squeeze %16 : memref<1x!tpu.dma_semaphore, #tpu.memory_space<semaphore_mem>> -> memref<!tpu.dma_semaphore, #tpu.memory_space<semaphore_mem>>
    tpu.enqueue_dma source(%14 : memref<1x128xf32, #tpu.memory_space<any>>) target(%15 : memref<1x128xf32, #tpu.memory_space<vmem>>) target_semaphore(%17 : memref<!tpu.dma_semaphore, #tpu.memory_space<semaphore_mem>>)
    %18 = arith.index_cast %arg0 : i32 to index
    %c3 = arith.constant 3 : index
    %19 = memref.load %arg1[%18, %c3] : memref<2x8xi32, #tpu.memory_space<smem>>
    %c3_i32 = arith.constant 3 : i32
    %c0_i32_9 = arith.constant 0 : i32
    %20 = tpu.memref_slice %arg2[%19, %c0_i32_9] : memref<24x128xf32, #tpu.memory_space<any>> -> memref<1x128xf32, #tpu.memory_space<any>>
    %c3_i32_10 = arith.constant 3 : i32
    %c0_i32_11 = arith.constant 0 : i32
    %21 = tpu.memref_slice %arg7[%c3_i32_10, %c0_i32_11] : memref<8x128xf32, #tpu.memory_space<vmem>> -> memref<1x128xf32, #tpu.memory_space<vmem>>
    %22 = tpu.memref_slice %arg8[%c3_i32] : memref<8x!tpu.dma_semaphore, #tpu.memory_space<semaphore_mem>> -> memref<1x!tpu.dma_semaphore, #tpu.memory_space<semaphore_mem>>
    %23 = tpu.memref_squeeze %22 : memref<1x!tpu.dma_semaphore, #tpu.memory_space<semaphore_mem>> -> memref<!tpu.dma_semaphore, #tpu.memory_space<semaphore_mem>>
    tpu.enqueue_dma source(%20 : memref<1x128xf32, #tpu.memory_space<any>>) target(%21 : memref<1x128xf32, #tpu.memory_space<vmem>>) target_semaphore(%23 : memref<!tpu.dma_semaphore, #tpu.memory_space<semaphore_mem>>)
    %24 = arith.index_cast %arg0 : i32 to index
    %c4 = arith.constant 4 : index
    %25 = memref.load %arg1[%24, %c4] : memref<2x8xi32, #tpu.memory_space<smem>>
    %c4_i32 = arith.constant 4 : i32
    %c0_i32_12 = arith.constant 0 : i32
    %26 = tpu.memref_slice %arg2[%25, %c0_i32_12] : memref<24x128xf32, #tpu.memory_space<any>> -> memref<1x128xf32, #tpu.memory_space<any>>
    %c4_i32_13 = arith.constant 4 : i32
    %c0_i32_14 = arith.constant 0 : i32
    %27 = tpu.memref_slice %arg7[%c4_i32_13, %c0_i32_14] : memref<8x128xf32, #tpu.memory_space<vmem>> -> memref<1x128xf32, #tpu.memory_space<vmem>>
    %28 = tpu.memref_slice %arg8[%c4_i32] : memref<8x!tpu.dma_semaphore, #tpu.memory_space<semaphore_mem>> -> memref<1x!tpu.dma_semaphore, #tpu.memory_space<semaphore_mem>>
    %29 = tpu.memref_squeeze %28 : memref<1x!tpu.dma_semaphore, #tpu.memory_space<semaphore_mem>> -> memref<!tpu.dma_semaphore, #tpu.memory_space<semaphore_mem>>
    tpu.enqueue_dma source(%26 : memref<1x128xf32, #tpu.memory_space<any>>) target(%27 : memref<1x128xf32, #tpu.memory_space<vmem>>) target_semaphore(%29 : memref<!tpu.dma_semaphore, #tpu.memory_space<semaphore_mem>>)
    %30 = arith.index_cast %arg0 : i32 to index
    %c5 = arith.constant 5 : index
    %31 = memref.load %arg1[%30, %c5] : memref<2x8xi32, #tpu.memory_space<smem>>
    %c5_i32 = arith.constant 5 : i32
    %c0_i32_15 = arith.constant 0 : i32
    %32 = tpu.memref_slice %arg2[%31, %c0_i32_15] : memref<24x128xf32, #tpu.memory_space<any>> -> memref<1x128xf32, #tpu.memory_space<any>>
    %c5_i32_16 = arith.constant 5 : i32
    %c0_i32_17 = arith.constant 0 : i32
    %33 = tpu.memref_slice %arg7[%c5_i32_16, %c0_i32_17] : memref<8x128xf32, #tpu.memory_space<vmem>> -> memref<1x128xf32, #tpu.memory_space<vmem>>
    %34 = tpu.memref_slice %arg8[%c5_i32] : memref<8x!tpu.dma_semaphore, #tpu.memory_space<semaphore_mem>> -> memref<1x!tpu.dma_semaphore, #tpu.memory_space<semaphore_mem>>
    %35 = tpu.memref_squeeze %34 : memref<1x!tpu.dma_semaphore, #tpu.memory_space<semaphore_mem>> -> memref<!tpu.dma_semaphore, #tpu.memory_space<semaphore_mem>>
    tpu.enqueue_dma source(%32 : memref<1x128xf32, #tpu.memory_space<any>>) target(%33 : memref<1x128xf32, #tpu.memory_space<vmem>>) target_semaphore(%35 : memref<!tpu.dma_semaphore, #tpu.memory_space<semaphore_mem>>)
    %36 = arith.index_cast %arg0 : i32 to index
    %c6 = arith.constant 6 : index
    %37 = memref.load %arg1[%36, %c6] : memref<2x8xi32, #tpu.memory_space<smem>>
    %c6_i32 = arith.constant 6 : i32
    %c0_i32_18 = arith.constant 0 : i32
    %38 = tpu.memref_slice %arg2[%37, %c0_i32_18] : memref<24x128xf32, #tpu.memory_space<any>> -> memref<1x128xf32, #tpu.memory_space<any>>
    %c6_i32_19 = arith.constant 6 : i32
    %c0_i32_20 = arith.constant 0 : i32
    %39 = tpu.memref_slice %arg7[%c6_i32_19, %c0_i32_20] : memref<8x128xf32, #tpu.memory_space<vmem>> -> memref<1x128xf32, #tpu.memory_space<vmem>>
    %40 = tpu.memref_slice %arg8[%c6_i32] : memref<8x!tpu.dma_semaphore, #tpu.memory_space<semaphore_mem>> -> memref<1x!tpu.dma_semaphore, #tpu.memory_space<semaphore_mem>>
    %41 = tpu.memref_squeeze %40 : memref<1x!tpu.dma_semaphore, #tpu.memory_space<semaphore_mem>> -> memref<!tpu.dma_semaphore, #tpu.memory_space<semaphore_mem>>
    tpu.enqueue_dma source(%38 : memref<1x128xf32, #tpu.memory_space<any>>) target(%39 : memref<1x128xf32, #tpu.memory_space<vmem>>) target_semaphore(%41 : memref<!tpu.dma_semaphore, #tpu.memory_space<semaphore_mem>>)
    %42 = arith.index_cast %arg0 : i32 to index
    %c7 = arith.constant 7 : index
    %43 = memref.load %arg1[%42, %c7] : memref<2x8xi32, #tpu.memory_space<smem>>
    %c7_i32 = arith.constant 7 : i32
    %c0_i32_21 = arith.constant 0 : i32
    %44 = tpu.memref_slice %arg2[%43, %c0_i32_21] : memref<24x128xf32, #tpu.memory_space<any>> -> memref<1x128xf32, #tpu.memory_space<any>>
    %c7_i32_22 = arith.constant 7 : i32
    %c0_i32_23 = arith.constant 0 : i32
    %45 = tpu.memref_slice %arg7[%c7_i32_22, %c0_i32_23] : memref<8x128xf32, #tpu.memory_space<vmem>> -> memref<1x128xf32, #tpu.memory_space<vmem>>
    %46 = tpu.memref_slice %arg8[%c7_i32] : memref<8x!tpu.dma_semaphore, #tpu.memory_space<semaphore_mem>> -> memref<1x!tpu.dma_semaphore, #tpu.memory_space<semaphore_mem>>
    %47 = tpu.memref_squeeze %46 : memref<1x!tpu.dma_semaphore, #tpu.memory_space<semaphore_mem>> -> memref<!tpu.dma_semaphore, #tpu.memory_space<semaphore_mem>>
    tpu.enqueue_dma source(%44 : memref<1x128xf32, #tpu.memory_space<any>>) target(%45 : memref<1x128xf32, #tpu.memory_space<vmem>>) target_semaphore(%47 : memref<!tpu.dma_semaphore, #tpu.memory_space<semaphore_mem>>)
    %c0_i32_24 = arith.constant 0 : i32
    %c0_i32_25 = arith.constant 0 : i32
    %c0_i32_26 = arith.constant 0 : i32
    %48 = tpu.memref_slice %arg2[%c0_i32_25, %c0_i32_26] : memref<24x128xf32, #tpu.memory_space<any>> -> memref<1x128xf32, #tpu.memory_space<any>>
    %c0_i32_27 = arith.constant 0 : i32
    %c0_i32_28 = arith.constant 0 : i32
    %49 = tpu.memref_slice %arg7[%c0_i32_27, %c0_i32_28] : memref<8x128xf32, #tpu.memory_space<vmem>> -> memref<1x128xf32, #tpu.memory_space<vmem>>
    %50 = tpu.memref_slice %arg8[%c0_i32_24] : memref<8x!tpu.dma_semaphore, #tpu.memory_space<semaphore_mem>> -> memref<1x!tpu.dma_semaphore, #tpu.memory_space<semaphore_mem>>
    %51 = tpu.memref_squeeze %50 : memref<1x!tpu.dma_semaphore, #tpu.memory_space<semaphore_mem>> -> memref<!tpu.dma_semaphore, #tpu.memory_space<semaphore_mem>>
    tpu.wait_dma2 semaphore(%51 : memref<!tpu.dma_semaphore, #tpu.memory_space<semaphore_mem>>) src(%48 : memref<1x128xf32, #tpu.memory_space<any>>) dst(%49 : memref<1x128xf32, #tpu.memory_space<vmem>>)
    %c1_i32_29 = arith.constant 1 : i32
    %c0_i32_30 = arith.constant 0 : i32
    %c0_i32_31 = arith.constant 0 : i32
    %52 = tpu.memref_slice %arg2[%c0_i32_30, %c0_i32_31] : memref<24x128xf32, #tpu.memory_space<any>> -> memref<1x128xf32, #tpu.memory_space<any>>
    %c1_i32_32 = arith.constant 1 : i32
    %c0_i32_33 = arith.constant 0 : i32
    %53 = tpu.memref_slice %arg7[%c1_i32_32, %c0_i32_33] : memref<8x128xf32, #tpu.memory_space<vmem>> -> memref<1x128xf32, #tpu.memory_space<vmem>>
    %54 = tpu.memref_slice %arg8[%c1_i32_29] : memref<8x!tpu.dma_semaphore, #tpu.memory_space<semaphore_mem>> -> memref<1x!tpu.dma_semaphore, #tpu.memory_space<semaphore_mem>>
    %55 = tpu.memref_squeeze %54 : memref<1x!tpu.dma_semaphore, #tpu.memory_space<semaphore_mem>> -> memref<!tpu.dma_semaphore, #tpu.memory_space<semaphore_mem>>
    tpu.wait_dma2 semaphore(%55 : memref<!tpu.dma_semaphore, #tpu.memory_space<semaphore_mem>>) src(%52 : memref<1x128xf32, #tpu.memory_space<any>>) dst(%53 : memref<1x128xf32, #tpu.memory_space<vmem>>)
    %c2_i32_34 = arith.constant 2 : i32
    %c0_i32_35 = arith.constant 0 : i32
    %c0_i32_36 = arith.constant 0 : i32
    %56 = tpu.memref_slice %arg2[%c0_i32_35, %c0_i32_36] : memref<24x128xf32, #tpu.memory_space<any>> -> memref<1x128xf32, #tpu.memory_space<any>>
    %c2_i32_37 = arith.constant 2 : i32
    %c0_i32_38 = arith.constant 0 : i32
    %57 = tpu.memref_slice %arg7[%c2_i32_37, %c0_i32_38] : memref<8x128xf32, #tpu.memory_space<vmem>> -> memref<1x128xf32, #tpu.memory_space<vmem>>
    %58 = tpu.memref_slice %arg8[%c2_i32_34] : memref<8x!tpu.dma_semaphore, #tpu.memory_space<semaphore_mem>> -> memref<1x!tpu.dma_semaphore, #tpu.memory_space<semaphore_mem>>
    %59 = tpu.memref_squeeze %58 : memref<1x!tpu.dma_semaphore, #tpu.memory_space<semaphore_mem>> -> memref<!tpu.dma_semaphore, #tpu.memory_space<semaphore_mem>>
    tpu.wait_dma2 semaphore(%59 : memref<!tpu.dma_semaphore, #tpu.memory_space<semaphore_mem>>) src(%56 : memref<1x128xf32, #tpu.memory_space<any>>) dst(%57 : memref<1x128xf32, #tpu.memory_space<vmem>>)
    %c3_i32_39 = arith.constant 3 : i32
    %c0_i32_40 = arith.constant 0 : i32
    %c0_i32_41 = arith.constant 0 : i32
    %60 = tpu.memref_slice %arg2[%c0_i32_40, %c0_i32_41] : memref<24x128xf32, #tpu.memory_space<any>> -> memref<1x128xf32, #tpu.memory_space<any>>
    %c3_i32_42 = arith.constant 3 : i32
    %c0_i32_43 = arith.constant 0 : i32
    %61 = tpu.memref_slice %arg7[%c3_i32_42, %c0_i32_43] : memref<8x128xf32, #tpu.memory_space<vmem>> -> memref<1x128xf32, #tpu.memory_space<vmem>>
    %62 = tpu.memref_slice %arg8[%c3_i32_39] : memref<8x!tpu.dma_semaphore, #tpu.memory_space<semaphore_mem>> -> memref<1x!tpu.dma_semaphore, #tpu.memory_space<semaphore_mem>>
    %63 = tpu.memref_squeeze %62 : memref<1x!tpu.dma_semaphore, #tpu.memory_space<semaphore_mem>> -> memref<!tpu.dma_semaphore, #tpu.memory_space<semaphore_mem>>
    tpu.wait_dma2 semaphore(%63 : memref<!tpu.dma_semaphore, #tpu.memory_space<semaphore_mem>>) src(%60 : memref<1x128xf32, #tpu.memory_space<any>>) dst(%61 : memref<1x128xf32, #tpu.memory_space<vmem>>)
    %c4_i32_44 = arith.constant 4 : i32
    %c0_i32_45 = arith.constant 0 : i32
    %c0_i32_46 = arith.constant 0 : i32
    %64 = tpu.memref_slice %arg2[%c0_i32_45, %c0_i32_46] : memref<24x128xf32, #tpu.memory_space<any>> -> memref<1x128xf32, #tpu.memory_space<any>>
    %c4_i32_47 = arith.constant 4 : i32
    %c0_i32_48 = arith.constant 0 : i32
    %65 = tpu.memref_slice %arg7[%c4_i32_47, %c0_i32_48] : memref<8x128xf32, #tpu.memory_space<vmem>> -> memref<1x128xf32, #tpu.memory_space<vmem>>
    %66 = tpu.memref_slice %arg8[%c4_i32_44] : memref<8x!tpu.dma_semaphore, #tpu.memory_space<semaphore_mem>> -> memref<1x!tpu.dma_semaphore, #tpu.memory_space<semaphore_mem>>
    %67 = tpu.memref_squeeze %66 : memref<1x!tpu.dma_semaphore, #tpu.memory_space<semaphore_mem>> -> memref<!tpu.dma_semaphore, #tpu.memory_space<semaphore_mem>>
    tpu.wait_dma2 semaphore(%67 : memref<!tpu.dma_semaphore, #tpu.memory_space<semaphore_mem>>) src(%64 : memref<1x128xf32, #tpu.memory_space<any>>) dst(%65 : memref<1x128xf32, #tpu.memory_space<vmem>>)
    %c5_i32_49 = arith.constant 5 : i32
    %c0_i32_50 = arith.constant 0 : i32
    %c0_i32_51 = arith.constant 0 : i32
    %68 = tpu.memref_slice %arg2[%c0_i32_50, %c0_i32_51] : memref<24x128xf32, #tpu.memory_space<any>> -> memref<1x128xf32, #tpu.memory_space<any>>
    %c5_i32_52 = arith.constant 5 : i32
    %c0_i32_53 = arith.constant 0 : i32
    %69 = tpu.memref_slice %arg7[%c5_i32_52, %c0_i32_53] : memref<8x128xf32, #tpu.memory_space<vmem>> -> memref<1x128xf32, #tpu.memory_space<vmem>>
    %70 = tpu.memref_slice %arg8[%c5_i32_49] : memref<8x!tpu.dma_semaphore, #tpu.memory_space<semaphore_mem>> -> memref<1x!tpu.dma_semaphore, #tpu.memory_space<semaphore_mem>>
    %71 = tpu.memref_squeeze %70 : memref<1x!tpu.dma_semaphore, #tpu.memory_space<semaphore_mem>> -> memref<!tpu.dma_semaphore, #tpu.memory_space<semaphore_mem>>
    tpu.wait_dma2 semaphore(%71 : memref<!tpu.dma_semaphore, #tpu.memory_space<semaphore_mem>>) src(%68 : memref<1x128xf32, #tpu.memory_space<any>>) dst(%69 : memref<1x128xf32, #tpu.memory_space<vmem>>)
    %c6_i32_54 = arith.constant 6 : i32
    %c0_i32_55 = arith.constant 0 : i32
    %c0_i32_56 = arith.constant 0 : i32
    %72 = tpu.memref_slice %arg2[%c0_i32_55, %c0_i32_56] : memref<24x128xf32, #tpu.memory_space<any>> -> memref<1x128xf32, #tpu.memory_space<any>>
    %c6_i32_57 = arith.constant 6 : i32
    %c0_i32_58 = arith.constant 0 : i32
    %73 = tpu.memref_slice %arg7[%c6_i32_57, %c0_i32_58] : memref<8x128xf32, #tpu.memory_space<vmem>> -> memref<1x128xf32, #tpu.memory_space<vmem>>
    %74 = tpu.memref_slice %arg8[%c6_i32_54] : memref<8x!tpu.dma_semaphore, #tpu.memory_space<semaphore_mem>> -> memref<1x!tpu.dma_semaphore, #tpu.memory_space<semaphore_mem>>
    %75 = tpu.memref_squeeze %74 : memref<1x!tpu.dma_semaphore, #tpu.memory_space<semaphore_mem>> -> memref<!tpu.dma_semaphore, #tpu.memory_space<semaphore_mem>>
    tpu.wait_dma2 semaphore(%75 : memref<!tpu.dma_semaphore, #tpu.memory_space<semaphore_mem>>) src(%72 : memref<1x128xf32, #tpu.memory_space<any>>) dst(%73 : memref<1x128xf32, #tpu.memory_space<vmem>>)
    %c7_i32_59 = arith.constant 7 : i32
    %c0_i32_60 = arith.constant 0 : i32
    %c0_i32_61 = arith.constant 0 : i32
    %76 = tpu.memref_slice %arg2[%c0_i32_60, %c0_i32_61] : memref<24x128xf32, #tpu.memory_space<any>> -> memref<1x128xf32, #tpu.memory_space<any>>
    %c7_i32_62 = arith.constant 7 : i32
    %c0_i32_63 = arith.constant 0 : i32
    %77 = tpu.memref_slice %arg7[%c7_i32_62, %c0_i32_63] : memref<8x128xf32, #tpu.memory_space<vmem>> -> memref<1x128xf32, #tpu.memory_space<vmem>>
    %78 = tpu.memref_slice %arg8[%c7_i32_59] : memref<8x!tpu.dma_semaphore, #tpu.memory_space<semaphore_mem>> -> memref<1x!tpu.dma_semaphore, #tpu.memory_space<semaphore_mem>>
    %79 = tpu.memref_squeeze %78 : memref<1x!tpu.dma_semaphore, #tpu.memory_space<semaphore_mem>> -> memref<!tpu.dma_semaphore, #tpu.memory_space<semaphore_mem>>
    tpu.wait_dma2 semaphore(%79 : memref<!tpu.dma_semaphore, #tpu.memory_space<semaphore_mem>>) src(%76 : memref<1x128xf32, #tpu.memory_space<any>>) dst(%77 : memref<1x128xf32, #tpu.memory_space<vmem>>)
    %c0_64 = arith.constant 0 : index
    %c0_65 = arith.constant 0 : index
    %80 = vector.load %arg7[%c0_64, %c0_65] : memref<8x128xf32, #tpu.memory_space<vmem>>, vector<8x128xf32>
    %c0_66 = arith.constant 0 : index
    %c0_67 = arith.constant 0 : index
    %81 = vector.load %arg3[%c0_66, %c0_67] : memref<32x128xf32, #tpu.memory_space<vmem>>, vector<32x128xf32>
    %cst = arith.constant 0.000000e+00 : f32
    %82 = vector.broadcast %cst : f32 to vector<1x32xf32>
    %cst_68 = arith.constant 0.000000e+00 : f32
    %83 = vector.broadcast %cst_68 : f32 to vector<1x32xf32>
    %84 = vector.extract_strided_slice %80 {offsets = [0, 0], sizes = [1, 128], strides = [1, 1]} : vector<8x128xf32> to vector<1x128xf32>
    %cst_69 = arith.constant dense<0.000000e+00> : vector<1x128xf32>
    %85 = tpu.matmul %82, %81, %cst_69 {dimension_numbers = #tpu.dot_dimension_numbers<[1], [0], [0], [1], [0, 0, 1, 1], [], []>} : vector<1x32xf32>, vector<32x128xf32>, vector<1x128xf32> -> vector<1x128xf32>
    %86 = arith.addf %84, %85 : vector<1x128xf32>
    %87 = arith.negf %86 : vector<1x128xf32>
    %88 = math.exp %87 : vector<1x128xf32>
    %cst_70 = arith.constant 1.000000e+00 : f32
    %89 = vector.broadcast %cst_70 : f32 to vector<1x128xf32>
    %90 = arith.addf %89, %88 : vector<1x128xf32>
    %91 = arith.divf %89, %90 : vector<1x128xf32>
    %92 = vector.extract_strided_slice %91 {offsets = [0, 0], sizes = [1, 32], strides = [1, 1]} : vector<1x128xf32> to vector<1x32xf32>
    %93 = vector.extract_strided_slice %91 {offsets = [0, 32], sizes = [1, 32], strides = [1, 1]} : vector<1x128xf32> to vector<1x32xf32>
    %94 = vector.extract_strided_slice %91 {offsets = [0, 64], sizes = [1, 32], strides = [1, 1]} : vector<1x128xf32> to vector<1x32xf32>
    %cst_71 = arith.constant 2.000000e+00 : f32
    %95 = vector.broadcast %cst_71 : f32 to vector<1x32xf32>
    %96 = arith.mulf %95, %94 : vector<1x32xf32>
    %cst_72 = arith.constant 1.000000e+00 : f32
    %97 = vector.broadcast %cst_72 : f32 to vector<1x32xf32>
    %98 = arith.subf %96, %97 : vector<1x32xf32>
    %99 = vector.extract_strided_slice %91 {offsets = [0, 96], sizes = [1, 32], strides = [1, 1]} : vector<1x128xf32> to vector<1x32xf32>
    %100 = arith.mulf %93, %83 : vector<1x32xf32>
    %101 = arith.mulf %92, %98 : vector<1x32xf32>
    %102 = arith.addf %100, %101 : vector<1x32xf32>
    %103 = math.tanh %102 : vector<1x32xf32>
    %104 = arith.mulf %99, %103 : vector<1x32xf32>
    %105 = vector.extract_strided_slice %80 {offsets = [1, 0], sizes = [1, 128], strides = [1, 1]} : vector<8x128xf32> to vector<1x128xf32>
    %cst_73 = arith.constant dense<0.000000e+00> : vector<1x128xf32>
    %106 = tpu.matmul %104, %81, %cst_73 {dimension_numbers = #tpu.dot_dimension_numbers<[1], [0], [0], [1], [0, 0, 1, 1], [], []>} : vector<1x32xf32>, vector<32x128xf32>, vector<1x128xf32> -> vector<1x128xf32>
    %107 = arith.addf %105, %106 : vector<1x128xf32>
    %108 = arith.negf %107 : vector<1x128xf32>
    %109 = math.exp %108 : vector<1x128xf32>
    %cst_74 = arith.constant 1.000000e+00 : f32
    %110 = vector.broadcast %cst_74 : f32 to vector<1x128xf32>
    %111 = arith.addf %110, %109 : vector<1x128xf32>
    %112 = arith.divf %110, %111 : vector<1x128xf32>
    %113 = vector.extract_strided_slice %112 {offsets = [0, 0], sizes = [1, 32], strides = [1, 1]} : vector<1x128xf32> to vector<1x32xf32>
    %114 = vector.extract_strided_slice %112 {offsets = [0, 32], sizes = [1, 32], strides = [1, 1]} : vector<1x128xf32> to vector<1x32xf32>
    %115 = vector.extract_strided_slice %112 {offsets = [0, 64], sizes = [1, 32], strides = [1, 1]} : vector<1x128xf32> to vector<1x32xf32>
    %cst_75 = arith.constant 2.000000e+00 : f32
    %116 = vector.broadcast %cst_75 : f32 to vector<1x32xf32>
    %117 = arith.mulf %116, %115 : vector<1x32xf32>
    %cst_76 = arith.constant 1.000000e+00 : f32
    %118 = vector.broadcast %cst_76 : f32 to vector<1x32xf32>
    %119 = arith.subf %117, %118 : vector<1x32xf32>
    %120 = vector.extract_strided_slice %112 {offsets = [0, 96], sizes = [1, 32], strides = [1, 1]} : vector<1x128xf32> to vector<1x32xf32>
    %121 = arith.mulf %114, %102 : vector<1x32xf32>
    %122 = arith.mulf %113, %119 : vector<1x32xf32>
    %123 = arith.addf %121, %122 : vector<1x32xf32>
    %124 = math.tanh %123 : vector<1x32xf32>
    %125 = arith.mulf %120, %124 : vector<1x32xf32>
    %126 = vector.extract_strided_slice %80 {offsets = [2, 0], sizes = [1, 128], strides = [1, 1]} : vector<8x128xf32> to vector<1x128xf32>
    %cst_77 = arith.constant dense<0.000000e+00> : vector<1x128xf32>
    %127 = tpu.matmul %125, %81, %cst_77 {dimension_numbers = #tpu.dot_dimension_numbers<[1], [0], [0], [1], [0, 0, 1, 1], [], []>} : vector<1x32xf32>, vector<32x128xf32>, vector<1x128xf32> -> vector<1x128xf32>
    %128 = arith.addf %126, %127 : vector<1x128xf32>
    %129 = arith.negf %128 : vector<1x128xf32>
    %130 = math.exp %129 : vector<1x128xf32>
    %cst_78 = arith.constant 1.000000e+00 : f32
    %131 = vector.broadcast %cst_78 : f32 to vector<1x128xf32>
    %132 = arith.addf %131, %130 : vector<1x128xf32>
    %133 = arith.divf %131, %132 : vector<1x128xf32>
    %134 = vector.extract_strided_slice %133 {offsets = [0, 0], sizes = [1, 32], strides = [1, 1]} : vector<1x128xf32> to vector<1x32xf32>
    %135 = vector.extract_strided_slice %133 {offsets = [0, 32], sizes = [1, 32], strides = [1, 1]} : vector<1x128xf32> to vector<1x32xf32>
    %136 = vector.extract_strided_slice %133 {offsets = [0, 64], sizes = [1, 32], strides = [1, 1]} : vector<1x128xf32> to vector<1x32xf32>
    %cst_79 = arith.constant 2.000000e+00 : f32
    %137 = vector.broadcast %cst_79 : f32 to vector<1x32xf32>
    %138 = arith.mulf %137, %136 : vector<1x32xf32>
    %cst_80 = arith.constant 1.000000e+00 : f32
    %139 = vector.broadcast %cst_80 : f32 to vector<1x32xf32>
    %140 = arith.subf %138, %139 : vector<1x32xf32>
    %141 = vector.extract_strided_slice %133 {offsets = [0, 96], sizes = [1, 32], strides = [1, 1]} : vector<1x128xf32> to vector<1x32xf32>
    %142 = arith.mulf %135, %123 : vector<1x32xf32>
    %143 = arith.mulf %134, %140 : vector<1x32xf32>
    %144 = arith.addf %142, %143 : vector<1x32xf32>
    %145 = math.tanh %144 : vector<1x32xf32>
    %146 = arith.mulf %141, %145 : vector<1x32xf32>
    %147 = vector.extract_strided_slice %80 {offsets = [3, 0], sizes = [1, 128], strides = [1, 1]} : vector<8x128xf32> to vector<1x128xf32>
    %cst_81 = arith.constant dense<0.000000e+00> : vector<1x128xf32>
    %148 = tpu.matmul %146, %81, %cst_81 {dimension_numbers = #tpu.dot_dimension_numbers<[1], [0], [0], [1], [0, 0, 1, 1], [], []>} : vector<1x32xf32>, vector<32x128xf32>, vector<1x128xf32> -> vector<1x128xf32>
    %149 = arith.addf %147, %148 : vector<1x128xf32>
    %150 = arith.negf %149 : vector<1x128xf32>
    %151 = math.exp %150 : vector<1x128xf32>
    %cst_82 = arith.constant 1.000000e+00 : f32
    %152 = vector.broadcast %cst_82 : f32 to vector<1x128xf32>
    %153 = arith.addf %152, %151 : vector<1x128xf32>
    %154 = arith.divf %152, %153 : vector<1x128xf32>
    %155 = vector.extract_strided_slice %154 {offsets = [0, 0], sizes = [1, 32], strides = [1, 1]} : vector<1x128xf32> to vector<1x32xf32>
    %156 = vector.extract_strided_slice %154 {offsets = [0, 32], sizes = [1, 32], strides = [1, 1]} : vector<1x128xf32> to vector<1x32xf32>
    %157 = vector.extract_strided_slice %154 {offsets = [0, 64], sizes = [1, 32], strides = [1, 1]} : vector<1x128xf32> to vector<1x32xf32>
    %cst_83 = arith.constant 2.000000e+00 : f32
    %158 = vector.broadcast %cst_83 : f32 to vector<1x32xf32>
    %159 = arith.mulf %158, %157 : vector<1x32xf32>
    %cst_84 = arith.constant 1.000000e+00 : f32
    %160 = vector.broadcast %cst_84 : f32 to vector<1x32xf32>
    %161 = arith.subf %159, %160 : vector<1x32xf32>
    %162 = vector.extract_strided_slice %154 {offsets = [0, 96], sizes = [1, 32], strides = [1, 1]} : vector<1x128xf32> to vector<1x32xf32>
    %163 = arith.mulf %156, %144 : vector<1x32xf32>
    %164 = arith.mulf %155, %161 : vector<1x32xf32>
    %165 = arith.addf %163, %164 : vector<1x32xf32>
    %166 = math.tanh %165 : vector<1x32xf32>
    %167 = arith.mulf %162, %166 : vector<1x32xf32>
    %168 = vector.extract_strided_slice %80 {offsets = [4, 0], sizes = [1, 128], strides = [1, 1]} : vector<8x128xf32> to vector<1x128xf32>
    %cst_85 = arith.constant dense<0.000000e+00> : vector<1x128xf32>
    %169 = tpu.matmul %167, %81, %cst_85 {dimension_numbers = #tpu.dot_dimension_numbers<[1], [0], [0], [1], [0, 0, 1, 1], [], []>} : vector<1x32xf32>, vector<32x128xf32>, vector<1x128xf32> -> vector<1x128xf32>
    %170 = arith.addf %168, %169 : vector<1x128xf32>
    %171 = arith.negf %170 : vector<1x128xf32>
    %172 = math.exp %171 : vector<1x128xf32>
    %cst_86 = arith.constant 1.000000e+00 : f32
    %173 = vector.broadcast %cst_86 : f32 to vector<1x128xf32>
    %174 = arith.addf %173, %172 : vector<1x128xf32>
    %175 = arith.divf %173, %174 : vector<1x128xf32>
    %176 = vector.extract_strided_slice %175 {offsets = [0, 0], sizes = [1, 32], strides = [1, 1]} : vector<1x128xf32> to vector<1x32xf32>
    %177 = vector.extract_strided_slice %175 {offsets = [0, 32], sizes = [1, 32], strides = [1, 1]} : vector<1x128xf32> to vector<1x32xf32>
    %178 = vector.extract_strided_slice %175 {offsets = [0, 64], sizes = [1, 32], strides = [1, 1]} : vector<1x128xf32> to vector<1x32xf32>
    %cst_87 = arith.constant 2.000000e+00 : f32
    %179 = vector.broadcast %cst_87 : f32 to vector<1x32xf32>
    %180 = arith.mulf %179, %178 : vector<1x32xf32>
    %cst_88 = arith.constant 1.000000e+00 : f32
    %181 = vector.broadcast %cst_88 : f32 to vector<1x32xf32>
    %182 = arith.subf %180, %181 : vector<1x32xf32>
    %183 = vector.extract_strided_slice %175 {offsets = [0, 96], sizes = [1, 32], strides = [1, 1]} : vector<1x128xf32> to vector<1x32xf32>
    %184 = arith.mulf %177, %165 : vector<1x32xf32>
    %185 = arith.mulf %176, %182 : vector<1x32xf32>
    %186 = arith.addf %184, %185 : vector<1x32xf32>
    %187 = math.tanh %186 : vector<1x32xf32>
    %188 = arith.mulf %183, %187 : vector<1x32xf32>
    %189 = vector.extract_strided_slice %80 {offsets = [5, 0], sizes = [1, 128], strides = [1, 1]} : vector<8x128xf32> to vector<1x128xf32>
    %cst_89 = arith.constant dense<0.000000e+00> : vector<1x128xf32>
    %190 = tpu.matmul %188, %81, %cst_89 {dimension_numbers = #tpu.dot_dimension_numbers<[1], [0], [0], [1], [0, 0, 1, 1], [], []>} : vector<1x32xf32>, vector<32x128xf32>, vector<1x128xf32> -> vector<1x128xf32>
    %191 = arith.addf %189, %190 : vector<1x128xf32>
    %192 = arith.negf %191 : vector<1x128xf32>
    %193 = math.exp %192 : vector<1x128xf32>
    %cst_90 = arith.constant 1.000000e+00 : f32
    %194 = vector.broadcast %cst_90 : f32 to vector<1x128xf32>
    %195 = arith.addf %194, %193 : vector<1x128xf32>
    %196 = arith.divf %194, %195 : vector<1x128xf32>
    %197 = vector.extract_strided_slice %196 {offsets = [0, 0], sizes = [1, 32], strides = [1, 1]} : vector<1x128xf32> to vector<1x32xf32>
    %198 = vector.extract_strided_slice %196 {offsets = [0, 32], sizes = [1, 32], strides = [1, 1]} : vector<1x128xf32> to vector<1x32xf32>
    %199 = vector.extract_strided_slice %196 {offsets = [0, 64], sizes = [1, 32], strides = [1, 1]} : vector<1x128xf32> to vector<1x32xf32>
    %cst_91 = arith.constant 2.000000e+00 : f32
    %200 = vector.broadcast %cst_91 : f32 to vector<1x32xf32>
    %201 = arith.mulf %200, %199 : vector<1x32xf32>
    %cst_92 = arith.constant 1.000000e+00 : f32
    %202 = vector.broadcast %cst_92 : f32 to vector<1x32xf32>
    %203 = arith.subf %201, %202 : vector<1x32xf32>
    %204 = vector.extract_strided_slice %196 {offsets = [0, 96], sizes = [1, 32], strides = [1, 1]} : vector<1x128xf32> to vector<1x32xf32>
    %205 = arith.mulf %198, %186 : vector<1x32xf32>
    %206 = arith.mulf %197, %203 : vector<1x32xf32>
    %207 = arith.addf %205, %206 : vector<1x32xf32>
    %208 = math.tanh %207 : vector<1x32xf32>
    %209 = arith.mulf %204, %208 : vector<1x32xf32>
    %210 = vector.extract_strided_slice %80 {offsets = [6, 0], sizes = [1, 128], strides = [1, 1]} : vector<8x128xf32> to vector<1x128xf32>
    %cst_93 = arith.constant dense<0.000000e+00> : vector<1x128xf32>
    %211 = tpu.matmul %209, %81, %cst_93 {dimension_numbers = #tpu.dot_dimension_numbers<[1], [0], [0], [1], [0, 0, 1, 1], [], []>} : vector<1x32xf32>, vector<32x128xf32>, vector<1x128xf32> -> vector<1x128xf32>
    %212 = arith.addf %210, %211 : vector<1x128xf32>
    %213 = arith.negf %212 : vector<1x128xf32>
    %214 = math.exp %213 : vector<1x128xf32>
    %cst_94 = arith.constant 1.000000e+00 : f32
    %215 = vector.broadcast %cst_94 : f32 to vector<1x128xf32>
    %216 = arith.addf %215, %214 : vector<1x128xf32>
    %217 = arith.divf %215, %216 : vector<1x128xf32>
    %218 = vector.extract_strided_slice %217 {offsets = [0, 0], sizes = [1, 32], strides = [1, 1]} : vector<1x128xf32> to vector<1x32xf32>
    %219 = vector.extract_strided_slice %217 {offsets = [0, 32], sizes = [1, 32], strides = [1, 1]} : vector<1x128xf32> to vector<1x32xf32>
    %220 = vector.extract_strided_slice %217 {offsets = [0, 64], sizes = [1, 32], strides = [1, 1]} : vector<1x128xf32> to vector<1x32xf32>
    %cst_95 = arith.constant 2.000000e+00 : f32
    %221 = vector.broadcast %cst_95 : f32 to vector<1x32xf32>
    %222 = arith.mulf %221, %220 : vector<1x32xf32>
    %cst_96 = arith.constant 1.000000e+00 : f32
    %223 = vector.broadcast %cst_96 : f32 to vector<1x32xf32>
    %224 = arith.subf %222, %223 : vector<1x32xf32>
    %225 = vector.extract_strided_slice %217 {offsets = [0, 96], sizes = [1, 32], strides = [1, 1]} : vector<1x128xf32> to vector<1x32xf32>
    %226 = arith.mulf %219, %207 : vector<1x32xf32>
    %227 = arith.mulf %218, %224 : vector<1x32xf32>
    %228 = arith.addf %226, %227 : vector<1x32xf32>
    %229 = math.tanh %228 : vector<1x32xf32>
    %230 = arith.mulf %225, %229 : vector<1x32xf32>
    %231 = vector.extract_strided_slice %80 {offsets = [7, 0], sizes = [1, 128], strides = [1, 1]} : vector<8x128xf32> to vector<1x128xf32>
    %cst_97 = arith.constant dense<0.000000e+00> : vector<1x128xf32>
    %232 = tpu.matmul %230, %81, %cst_97 {dimension_numbers = #tpu.dot_dimension_numbers<[1], [0], [0], [1], [0, 0, 1, 1], [], []>} : vector<1x32xf32>, vector<32x128xf32>, vector<1x128xf32> -> vector<1x128xf32>
    %233 = arith.addf %231, %232 : vector<1x128xf32>
    %234 = arith.negf %233 : vector<1x128xf32>
    %235 = math.exp %234 : vector<1x128xf32>
    %cst_98 = arith.constant 1.000000e+00 : f32
    %236 = vector.broadcast %cst_98 : f32 to vector<1x128xf32>
    %237 = arith.addf %236, %235 : vector<1x128xf32>
    %238 = arith.divf %236, %237 : vector<1x128xf32>
    %239 = vector.extract_strided_slice %238 {offsets = [0, 0], sizes = [1, 32], strides = [1, 1]} : vector<1x128xf32> to vector<1x32xf32>
    %240 = vector.extract_strided_slice %238 {offsets = [0, 32], sizes = [1, 32], strides = [1, 1]} : vector<1x128xf32> to vector<1x32xf32>
    %241 = vector.extract_strided_slice %238 {offsets = [0, 64], sizes = [1, 32], strides = [1, 1]} : vector<1x128xf32> to vector<1x32xf32>
    %cst_99 = arith.constant 2.000000e+00 : f32
    %242 = vector.broadcast %cst_99 : f32 to vector<1x32xf32>
    %243 = arith.mulf %242, %241 : vector<1x32xf32>
    %cst_100 = arith.constant 1.000000e+00 : f32
    %244 = vector.broadcast %cst_100 : f32 to vector<1x32xf32>
    %245 = arith.subf %243, %244 : vector<1x32xf32>
    %246 = vector.extract_strided_slice %238 {offsets = [0, 96], sizes = [1, 32], strides = [1, 1]} : vector<1x128xf32> to vector<1x32xf32>
    %247 = arith.mulf %240, %228 : vector<1x32xf32>
    %248 = arith.mulf %239, %245 : vector<1x32xf32>
    %249 = arith.addf %247, %248 : vector<1x32xf32>
    %250 = math.tanh %249 : vector<1x32xf32>
    %251 = arith.mulf %246, %250 : vector<1x32xf32>
    %252 = tpu.concatenate %104, %125, %146, %167, %188, %209, %230, %251 in 0 : vector<1x32xf32>, vector<1x32xf32>, vector<1x32xf32>, vector<1x32xf32>, vector<1x32xf32>, vector<1x32xf32>, vector<1x32xf32>, vector<1x32xf32> -> vector<8x32xf32>
    %c0_101 = arith.constant 0 : index
    %c0_102 = arith.constant 0 : index
    %253 = vector.load %arg4[%c0_101, %c0_102] : memref<32x128xf32, #tpu.memory_space<vmem>>, vector<32x128xf32>
    %cst_103 = arith.constant dense<0.000000e+00> : vector<8x128xf32>
    %254 = tpu.matmul %252, %253, %cst_103 {dimension_numbers = #tpu.dot_dimension_numbers<[1], [0], [0], [1], [0, 0, 1, 1], [], []>} : vector<8x32xf32>, vector<32x128xf32>, vector<8x128xf32> -> vector<8x128xf32>
    %c0_104 = arith.constant 0 : index
    %c0_105 = arith.constant 0 : index
    %255 = vector.load %arg5[%c0_104, %c0_105] : memref<1x128xf32, #tpu.memory_space<vmem>>, vector<1x128xf32>
    %256 = vector.broadcast %255 : vector<1x128xf32> to vector<8x128xf32>
    %257 = arith.addf %254, %256 : vector<8x128xf32>
    %cst_106 = arith.constant dense<0xFF800000> : vector<8xf32>
    %258 = vector.multi_reduction <maximumf>, %257, %cst_106 [1] : vector<8x128xf32> to vector<8xf32>
    %259 = vector.shape_cast %258 : vector<8xf32> to vector<8x1xf32>
    %260 = vector.broadcast %259 : vector<8x1xf32> to vector<8x128xf32>
    %261 = arith.subf %257, %260 : vector<8x128xf32>
    %262 = math.exp %261 : vector<8x128xf32>
    %cst_107 = arith.constant dense<0.000000e+00> : vector<8xf32>
    %263 = vector.multi_reduction <add>, %262, %cst_107 [1] : vector<8x128xf32> to vector<8xf32>
    %264 = vector.shape_cast %263 : vector<8xf32> to vector<8x1xf32>
    %265 = math.log %264 : vector<8x1xf32>
    %266 = vector.broadcast %265 : vector<8x1xf32> to vector<8x128xf32>
    %267 = arith.subf %261, %266 : vector<8x128xf32>
    %c0_108 = arith.constant 0 : index
    %c0_109 = arith.constant 0 : index
    %c0_110 = arith.constant 0 : index
    %268 = vector.load %arg6[%c0_108, %c0_109, %c0_110] : memref<1x8x128xf32, #tpu.memory_space<vmem>>, vector<1x8x128xf32>
    %269 = vector.shape_cast %268 : vector<1x8x128xf32> to vector<8x128xf32>
    %270 = vector.shape_cast %267 : vector<8x128xf32> to vector<1x8x128xf32>
    tpu.vector_store %arg6[%c0_108, %c0_109, %c0_110], %270 {strides = array<i32>} : memref<1x8x128xf32, #tpu.memory_space<vmem>>, vector<1x8x128xf32>,
    return
  }
  func.func @transform_1(%arg0: i32, %arg1: memref<2x8xi32, #tpu.memory_space<smem>>) -> (i32, i32) {
    %c0_i32 = arith.constant 0 : i32
    %c0_i32_0 = arith.constant 0 : i32
    %c0_i32_1 = arith.constant 0 : i32
    return %c0_i32, %c0_i32_0 : i32, i32
  }
  func.func @transform_2(%arg0: i32, %arg1: memref<2x8xi32, #tpu.memory_space<smem>>) -> (i32, i32) {
    %c0_i32 = arith.constant 0 : i32
    %c0_i32_0 = arith.constant 0 : i32
    %c0_i32_1 = arith.constant 0 : i32
    return %c0_i32, %c0_i32_0 : i32, i32
  }
  func.func @transform_3(%arg0: i32, %arg1: memref<2x8xi32, #tpu.memory_space<smem>>) -> (i32, i32) {
    %c0_i32 = arith.constant 0 : i32
    %c0_i32_0 = arith.constant 0 : i32
    %c0_i32_1 = arith.constant 0 : i32
    return %c0_i32, %c0_i32_0 : i32, i32
  }
  func.func @transform_4(%arg0: i32, %arg1: memref<2x8xi32, #tpu.memory_space<smem>>) -> (i32, i32, i32) {
    %c0_i32 = arith.constant 0 : i32
    %c0_i32_0 = arith.constant 0 : i32
    %c0_i32_1 = arith.constant 0 : i32
    return %arg0, %c0_i32, %c0_i32_0 : i32, i32, i32
  }
}

</mosaic_0001>

<llo_original>
// kernel: tpu_custom_call.1
$region0: #{tpu_custom_call.1}
  #allocation0 [shape = 'u32[]', space=smem, size = 0x4, offset = 0x4, fixed_abs, tag = 'smem constant byte address 0x4 - core index']
  #allocation1 [shape = 'u32[144,128]{1,0:T(1,128)}', space=vmem, size = 0x12000, scoped, tag = 'internal scratch']
  #allocation2 [shape = 'f32[8,128]{1,0:T(8,128)}', space=vmem, size = 0x1000, scoped, tag = 'scratch operand']
  #allocation3 [shape = 's32[8]{0}', space=sflag, size = 0x20, scoped, tag = 'scratch operand']
  #allocation4 [shape = 's32[1]{0}', space=sflag, size = 0x4, scoped, tag = 'scoped memory for tpu_custom_call.1']
  #allocation5 [shape = 'u8[1024]{0}', space=smem, size = 0x400, scoped, tag = 'prefetched SMEM operand 0']
  #allocation12 [shape = 's32[]', space=sflag, size = 0x4, offset = 0, fixed_abs, tag = 'sflag constant byte address 0x0 - dummy sync flag']
  #allocation13 [shape = 's32[]', space=sflag, size = 0x4, offset = 0, fixed_abs, tag = 'sflag constant byte address 0x0 - dummy sync flag']
  #allocation14 [shape = 'u32[]', space=smem, size = 0x4, offset = 0x44, fixed_abs, tag = 'smem constant byte address 0x44 - assertion arg 0']
  #allocation15 [shape = 'u32[]', space=smem, size = 0x4, offset = 0x48, fixed_abs, tag = 'smem constant byte address 0x48 - assertion arg 1']
  #allocation16 [shape = 's32[]', space=sflag, size = 0x4, offset = 0, fixed_abs, tag = 'sflag constant byte address 0x0 - dummy sync flag']
  #allocation17 [shape = 's32[]', space=sflag, size = 0x4, offset = 0, fixed_abs, tag = 'sflag constant byte address 0x0 - dummy sync flag']
  #allocation18 [shape = 's32[]', space=sflag, size = 0x4, offset = 0, fixed_abs, tag = 'sflag constant byte address 0x0 - dummy sync flag']
  #allocation19 [shape = 's32[]', space=sflag, size = 0x4, offset = 0, fixed_abs, tag = 'sflag constant byte address 0x0 - dummy sync flag']
  #allocation20 [shape = 's32[]', space=sflag, size = 0x4, offset = 0, fixed_abs, tag = 'sflag constant byte address 0x0 - dummy sync flag']
  #allocation21 [shape = 's32[]', space=sflag, size = 0x4, offset = 0, fixed_abs, tag = 'sflag constant byte address 0x0 - dummy sync flag']
  #allocation22 [shape = 's32[]', space=sflag, size = 0x4, offset = 0, fixed_abs, tag = 'sflag constant byte address 0x0 - dummy sync flag']
  #allocation23 [shape = 's32[]', space=sflag, size = 0x4, offset = 0, fixed_abs, tag = 'sflag constant byte address 0x0 - dummy sync flag']
  #allocation24 [shape = 's32[]', space=sflag, size = 0x4, offset = 0, fixed_abs, tag = 'sflag constant byte address 0x0 - dummy sync flag']
  #allocation25 [shape = 's32[]', space=sflag, size = 0x4, offset = 0, fixed_abs, tag = 'sflag constant byte address 0x0 - dummy sync flag']
  #allocation26 [shape = 's32[]', space=sflag, size = 0x4, offset = 0, fixed_abs, tag = 'sflag constant byte address 0x0 - dummy sync flag']
  #allocation27 [shape = 's32[]', space=sflag, size = 0x4, offset = 0, fixed_abs, tag = 'sflag constant byte address 0x0 - dummy sync flag']
  #allocation28 [shape = 's32[]', space=sflag, size = 0x4, offset = 0, fixed_abs, tag = 'sflag constant byte address 0x0 - dummy sync flag']
  #allocation29 [shape = 's32[]', space=sflag, size = 0x4, offset = 0, fixed_abs, tag = 'sflag constant byte address 0x0 - dummy sync flag']
  %s0 = inlined_call_operand.hbm [shape: s32[2,8], index: 0, kind: input, shape index: {}]
  %s1 = inlined_call_operand.hbm [shape: f32[24,128], index: 1, kind: input, shape index: {}]
  %s2 = inlined_call_operand.hbm [shape: f32[32,128], index: 2, kind: input, shape index: {}]
  %s3 = inlined_call_operand.hbm [shape: f32[32,128], index: 3, kind: input, shape index: {}]
  %s4 = inlined_call_operand.vmem [shape: f32[1,128], index: 4, kind: input, shape index: {}]
  %s5 = inlined_call_operand.hbm [shape: f32[2,8,128], index: 5, kind: output, shape index: {}]
  %s6 = sld [smem:[#allocation0]]
  $region85: #{tpu_custom_call.1} parent=0
    _
  %s8 = ssub.s32 1, %s6
  %s9 = scalar_select 0, %s8, %s6
  %11 = dma.hbm_to_smem %s0, 32, [#allocation5], [#allocation4]
  %12 = dma.done [#allocation4], 32
  %13 = sfence
  $region1: #{tpu_custom_call.1} parent=0
    #allocation6 [shape = 'u8[16384]{0}', space=vmem, size = 0x4000, scoped, tag = 'input window, operand 2, single buffered']
    #allocation7 [shape = 's32[2]{0}', space=sflag, size = 0x8, scoped, tag = 'scoped memory for tpu_custom_call.1']
    #allocation8 [shape = 's32[2]{0}', space=sflag, size = 0x8, scoped, tag = 'scoped memory for tpu_custom_call.1']
    #allocation9 [shape = 'u8[16384]{0}', space=vmem, size = 0x4000, scoped, tag = 'input window, operand 3, single buffered']
    #allocation10 [shape = 's32[1]{0}', space=sflag, size = 0x4, scoped, tag = 'scoped memory for tpu_custom_call.1']
    #allocation11 [shape = 'u8[8192]{0}', space=vmem, size = 0x2000, scoped, tag = 'output window, operand 0']
    %14 = vsyncpa [#allocation7], 0
    %15 = vsyncpa [#allocation10], 0
    %16 = vsyncpa [#allocation8], 0
    %s17 = scalar_lea.sflag [#allocation8], 1
    %18 = vsyncpa %s17, 0
    loop: start=0, step=1, limit=4
    $region2: #{tpu_custom_call.1} parent=1 // loop_pre_header
      _
    $region3: #{tpu_custom_call.1} parent=1 // loop_header
      %s20 = sphi 0, %s24
      %p21 = scmp.ge.s32.totalorder %s20, 4
      %s28 = sphi 0, %s28
      %s30 = sphi 0, %s28
      %s31 = sphi 0, %s30
      %s45 = sphi 0, %s31
      %s49 = sphi 0, %s49
      %s51 = sphi 0, %s49
      %s52 = sphi 0, %s51
      %s66 = sphi 0, %s52
      %s70 = sphi 0, %s70
      %s72 = sphi 0, %s70
      %s73 = sphi 0, %s72
      %s87 = sphi 0, %s73
      %s93 = sphi 0, %s95
      %s96 = sphi 0, %s93
      %s97 = sphi 0, %s96
      %s113 = sphi 0, %s97
    $region4: #{tpu_custom_call.1} parent=1 // loop_header_branch
      %23 = sbr.rel (%p21) target = $region8
    $region5: #{tpu_custom_call.1} parent=1 // loop_body
      %s25 = ssub.s32 %s20, 1
      %s26 = ssub.s32 %s20, 2
      %s27 = sadd.s32 %s20, 1
      %s29 = sadd.s32 %s28, 1
      %p32 = scmp.eq.s32.totalorder %s20, 1
      %p33 = scmp.ne.s32.totalorder %s28, %s30
      %p34 = scmp.eq.s32.totalorder %s20, 0
      %p35 = por %p33, %p34
      %p36 = scmp.ne.s32.totalorder %s28, %s30
      %p37 = scmp.eq.s32.totalorder %s25, 1
      %p38 = por %p36, %p37
      %p39 = scmp.ne.s32.totalorder %s30, %s31
      %p40 = scmp.eq.s32.totalorder %s25, 0
      %p41 = por %p39, %p40
      %p42 = scmp.ne.s32.totalorder %s30, %s31
      %p43 = scmp.eq.s32.totalorder %s26, 1
      %p44 = por %p42, %p43
      %p46 = scmp.ne.s32.totalorder %s31, %s45
      %p47 = scmp.eq.s32.totalorder %s26, 0
      %p48 = por %p46, %p47
      %s50 = sadd.s32 %s49, 1
      %p53 = scmp.eq.s32.totalorder %s20, 1
      %p54 = scmp.ne.s32.totalorder %s49, %s51
      %p55 = scmp.eq.s32.totalorder %s20, 0
      %p56 = por %p54, %p55
      %p57 = scmp.ne.s32.totalorder %s49, %s51
      %p58 = scmp.eq.s32.totalorder %s25, 1
      %p59 = por %p57, %p58
      %p60 = scmp.ne.s32.totalorder %s51, %s52
      %p61 = scmp.eq.s32.totalorder %s25, 0
      %p62 = por %p60, %p61
      %p63 = scmp.ne.s32.totalorder %s51, %s52
      %p64 = scmp.eq.s32.totalorder %s26, 1
      %p65 = por %p63, %p64
      %p67 = scmp.ne.s32.totalorder %s52, %s66
      %p68 = scmp.eq.s32.totalorder %s26, 0
      %p69 = por %p67, %p68
      %s71 = sadd.s32 %s70, 1
      %p74 = scmp.eq.s32.totalorder %s20, 1
      %p75 = scmp.ne.s32.totalorder %s70, %s72
      %p76 = scmp.eq.s32.totalorder %s20, 0
      %p77 = por %p75, %p76
      %p78 = scmp.ne.s32.totalorder %s70, %s72
      %p79 = scmp.eq.s32.totalorder %s25, 1
      %p80 = por %p78, %p79
      %p81 = scmp.ne.s32.totalorder %s72, %s73
      %p82 = scmp.eq.s32.totalorder %s25, 0
      %p83 = por %p81, %p82
      %p84 = scmp.ne.s32.totalorder %s72, %s73
      %p85 = scmp.eq.s32.totalorder %s26, 1
      %p86 = por %p84, %p85
      %p88 = scmp.ne.s32.totalorder %s73, %s87
      %p89 = scmp.eq.s32.totalorder %s26, 0
      %p90 = por %p88, %p89
      %s91 = ssub.s32 %s20, %s27
      %p92 = scmp.eq.s32.totalorder %s91, 0
      %s94 = sadd.s32 %s93, 1
      %s95 = scalar_select %p92, %s93, %s94
      %p98 = pneg %p92
      %p99 = scmp.eq.s32.totalorder %s20, 1
      %p100 = por %p98, %p99
      %p101 = scmp.ne.s32.totalorder %s93, %s96
      %p102 = scmp.eq.s32.totalorder %s20, 0
      %p103 = por %p101, %p102
      %p104 = scmp.ne.s32.totalorder %s93, %s96
      %p105 = scmp.eq.s32.totalorder %s25, 1
      %p106 = por %p104, %p105
      %p107 = scmp.ne.s32.totalorder %s96, %s97
      %p108 = scmp.eq.s32.totalorder %s25, 0
      %p109 = por %p107, %p108
      %p110 = scmp.ne.s32.totalorder %s96, %s97
      %p111 = scmp.eq.s32.totalorder %s26, 1
      %p112 = por %p110, %p111
      %p114 = scmp.ne.s32.totalorder %s97, %s113
      %p115 = scmp.eq.s32.totalorder %s26, 0
      %p116 = por %p114, %p115
      %p117 = scmp.le.s32.totalorder 1, %s20
      %p118 = scmp.lt.s32.totalorder %s20, 3
      %p119 = pnand %p117, %p118
      %p120 = pneg %p119
      // Predicated region
      $region9: #{tpu_custom_call.1} parent=5 // pred_check
        _
      $region10: #{tpu_custom_call.1} parent=5 // pred_check_branch
        %122 = sbr.rel (%p119) target = $region12
      $region11: #{tpu_custom_call.1} parent=5 // pred_region
        %s123 = ssub.s32 %s20, 1
        // Predicated region
        $region13: #{tpu_custom_call.1} parent=11 // pred_check
          %p124 = pneg %p41
        $region14: #{tpu_custom_call.1} parent=11 // pred_check_branch
          %126 = sbr.rel (%p124) target = $region16
        $region15: #{tpu_custom_call.1} parent=11 // pred_region
          %s128 = ssub.s32 512, 512
          %129 = vsyncadd [#allocation7], %s128
          %s130 = sshll.u32 [#allocation6], 4
          %s131 = int_to_ptr.vmem [resolvable:$true] %s130
          %136 = dma.hbm_to_vmem [thread:$0]  %s2, 512, %s131, [#allocation7], 128, 128, 8
        $region16: #{tpu_custom_call.1} parent=11 // pred_fallthru
          _
        // Predicated region
        $region17: #{tpu_custom_call.1} parent=11 // pred_check
          %p137 = pneg %p62
        $region18: #{tpu_custom_call.1} parent=11 // pred_check_branch
          %139 = sbr.rel (%p137) target = $region20
        $region19: #{tpu_custom_call.1} parent=11 // pred_region
          %s141 = ssub.s32 512, 512
          %142 = vsyncadd [#allocation10], %s141
          %s143 = sshll.u32 [#allocation9], 4
          %s144 = int_to_ptr.vmem [resolvable:$true] %s143
          %149 = dma.hbm_to_vmem [thread:$0]  %s3, 512, %s144, [#allocation10], 128, 128, 8
        $region20: #{tpu_custom_call.1} parent=11 // pred_fallthru
          _
        // Predicated region
        $region21: #{tpu_custom_call.1} parent=11 // pred_check
          %p150 = pneg %p83
        $region22: #{tpu_custom_call.1} parent=11 // pred_check_branch
          %152 = sbr.rel (%p150) target = $region24
        $region23: #{tpu_custom_call.1} parent=11 // pred_region
          _
        $region24: #{tpu_custom_call.1} parent=11 // pred_fallthru
          _
      $region12: #{tpu_custom_call.1} parent=5 // pred_fallthru
        _
      %p153 = scmp.lt.s32.totalorder %s20, 2
      // Predicated region
      $region25: #{tpu_custom_call.1} parent=5 // pred_check
        %p154 = pneg %p153
      $region26: #{tpu_custom_call.1} parent=5 // pred_check_branch
        %156 = sbr.rel (%p154) target = $region28
      $region27: #{tpu_custom_call.1} parent=5 // pred_region
        _
      $region28: #{tpu_custom_call.1} parent=5 // pred_fallthru
        _
      %p157 = scmp.le.s32.totalorder 1, %s20
      %p158 = scmp.lt.s32.totalorder %s20, 3
      %p159 = pnand %p157, %p158
      %p160 = pneg %p159
      // Predicated region
      $region29: #{tpu_custom_call.1} parent=5 // pred_check
        _
      $region30: #{tpu_custom_call.1} parent=5 // pred_check_branch
        %162 = sbr.rel (%p159) target = $region32
      $region31: #{tpu_custom_call.1} parent=5 // pred_region
        %s163 = ssub.s32 %s20, 1
        // Predicated region
        $region33: #{tpu_custom_call.1} parent=31 // pred_check
          %p164 = pneg %p41
        $region34: #{tpu_custom_call.1} parent=31 // pred_check_branch
          %166 = sbr.rel (%p164) target = $region36
        $region35: #{tpu_custom_call.1} parent=31 // pred_region
          %167 = dma.done [#allocation7], 512
        $region36: #{tpu_custom_call.1} parent=31 // pred_fallthru
          _
        // Predicated region
        $region37: #{tpu_custom_call.1} parent=31 // pred_check
          %p168 = pneg %p62
        $region38: #{tpu_custom_call.1} parent=31 // pred_check_branch
          %170 = sbr.rel (%p168) target = $region40
        $region39: #{tpu_custom_call.1} parent=31 // pred_region
          %171 = dma.done [#allocation10], 512
        $region40: #{tpu_custom_call.1} parent=31 // pred_fallthru
          _
        %p172 = pneg %p41
        %p173 = pneg %p38
        %p174 = pneg %p62
        %p175 = pneg %p59
        %p176 = pneg %p83
        %p177 = pneg %p80
        %p178 = pneg %p109
        %p179 = pneg %p106
        %s180 = sand.u32 %s96, 1
        %s181 = scalar_lea.sflag [#allocation8], %s180
        %s182 = sand.u32 %s96, 1
        %s183 = smul.addr %s182, 8
        %s184 = scalar_lea.vmem [#allocation11], %s183
        %s185 = smul.u32 %s25, 128
        %s186 = sld [smem:[#allocation5 + %s185]]
        %s187 = smul.addr %s186, 16
        %s188 = scalar_lea.hbm %s1, %s187
        // Predicated region
        $region41: #{tpu_custom_call.1} parent=31 // pred_check
          _
        $region42: #{tpu_custom_call.1} parent=31 // pred_check_branch
          %190 = sbr.rel target = $region44
        $region43: #{tpu_custom_call.1} parent=31 // pred_region
          %191 = sst [smem:[#allocation14]] [#allocation13]
          %192 = sst [smem:[#allocation15]] [#allocation12]
        $region44: #{tpu_custom_call.1} parent=31 // pred_fallthru
          _
        %194 = shalt.err (0)
        %s196 = sshll.u32 [#allocation2], 4
        %s197 = int_to_ptr.vmem [resolvable:$true] %s196
        %199 = dma.hbm_to_vmem [thread:$0]  %s188, 16, %s197, [#allocation3]
        %s200 = sadd.s32 %s185, 1
        %s201 = sld [smem:[#allocation5 + %s200]]
        %s202 = smul.addr %s201, 16
        %s203 = scalar_lea.hbm %s1, %s202
        %s204 = scalar_lea.vmem [#allocation2], 1
        %s205 = scalar_lea.sflag [#allocation3], 1
        // Predicated region
        $region45: #{tpu_custom_call.1} parent=31 // pred_check
          _
        $region46: #{tpu_custom_call.1} parent=31 // pred_check_branch
          %207 = sbr.rel target = $region48
        $region47: #{tpu_custom_call.1} parent=31 // pred_region
          %208 = sst [smem:[#allocation14]] [#allocation17]
          %209 = sst [smem:[#allocation15]] [#allocation16]
        $region48: #{tpu_custom_call.1} parent=31 // pred_fallthru
          _
        %211 = shalt.err (0)
        %s213 = sshll.u32 %s204, 4
        %s214 = int_to_ptr.vmem [resolvable:$true] %s213
        %216 = dma.hbm_to_vmem [thread:$0]  %s203, 16, %s214, %s205
        %s217 = sadd.s32 %s185, 2
        %s218 = sld [smem:[#allocation5 + %s217]]
        %s219 = smul.addr %s218, 16
        %s220 = scalar_lea.hbm %s1, %s219
        %s221 = scalar_lea.vmem [#allocation2], 2
        %s222 = scalar_lea.sflag [#allocation3], 2
        // Predicated region
        $region49: #{tpu_custom_call.1} parent=31 // pred_check
          _
        $region50: #{tpu_custom_call.1} parent=31 // pred_check_branch
          %224 = sbr.rel target = $region52
        $region51: #{tpu_custom_call.1} parent=31 // pred_region
          %225 = sst [smem:[#allocation14]] [#allocation19]
          %226 = sst [smem:[#allocation15]] [#allocation18]
        $region52: #{tpu_custom_call.1} parent=31 // pred_fallthru
          _
        %228 = shalt.err (0)
        %s230 = sshll.u32 %s221, 4
        %s231 = int_to_ptr.vmem [resolvable:$true] %s230
        %233 = dma.hbm_to_vmem [thread:$0]  %s220, 16, %s231, %s222
        %s234 = sadd.s32 %s185, 3
        %s235 = sld [smem:[#allocation5 + %s234]]
        %s236 = smul.addr %s235, 16
        %s237 = scalar_lea.hbm %s1, %s236
        %s238 = scalar_lea.vmem [#allocation2], 3
        %s239 = scalar_lea.sflag [#allocation3], 3
        // Predicated region
        $region53: #{tpu_custom_call.1} parent=31 // pred_check
          _
        $region54: #{tpu_custom_call.1} parent=31 // pred_check_branch
          %241 = sbr.rel target = $region56
        $region55: #{tpu_custom_call.1} parent=31 // pred_region
          %242 = sst [smem:[#allocation14]] [#allocation21]
          %243 = sst [smem:[#allocation15]] [#allocation20]
        $region56: #{tpu_custom_call.1} parent=31 // pred_fallthru
          _
        %245 = shalt.err (0)
        %s247 = sshll.u32 %s238, 4
        %s248 = int_to_ptr.vmem [resolvable:$true] %s247
        %250 = dma.hbm_to_vmem [thread:$0]  %s237, 16, %s248, %s239
        %s251 = sadd.s32 %s185, 4
        %s252 = sld [smem:[#allocation5 + %s251]]
        %s253 = smul.addr %s252, 16
        %s254 = scalar_lea.hbm %s1, %s253
        %s255 = scalar_lea.vmem [#allocation2], 4
        %s256 = scalar_lea.sflag [#allocation3], 4
        // Predicated region
        $region57: #{tpu_custom_call.1} parent=31 // pred_check
          _
        $region58: #{tpu_custom_call.1} parent=31 // pred_check_branch
          %258 = sbr.rel target = $region60
        $region59: #{tpu_custom_call.1} parent=31 // pred_region
          %259 = sst [smem:[#allocation14]] [#allocation23]
          %260 = sst [smem:[#allocation15]] [#allocation22]
        $region60: #{tpu_custom_call.1} parent=31 // pred_fallthru
          _
        %262 = shalt.err (0)
        %s264 = sshll.u32 %s255, 4
        %s265 = int_to_ptr.vmem [resolvable:$true] %s264
        %267 = dma.hbm_to_vmem [thread:$0]  %s254, 16, %s265, %s256
        %s268 = sadd.s32 %s185, 5
        %s269 = sld [smem:[#allocation5 + %s268]]
        %s270 = smul.addr %s269, 16
        %s271 = scalar_lea.hbm %s1, %s270
        %s272 = scalar_lea.vmem [#allocation2], 5
        %s273 = scalar_lea.sflag [#allocation3], 5
        // Predicated region
        $region61: #{tpu_custom_call.1} parent=31 // pred_check
          _
        $region62: #{tpu_custom_call.1} parent=31 // pred_check_branch
          %275 = sbr.rel target = $region64
        $region63: #{tpu_custom_call.1} parent=31 // pred_region
          %276 = sst [smem:[#allocation14]] [#allocation25]
          %277 = sst [smem:[#allocation15]] [#allocation24]
        $region64: #{tpu_custom_call.1} parent=31 // pred_fallthru
          _
        %279 = shalt.err (0)
        %s281 = sshll.u32 %s272, 4
        %s282 = int_to_ptr.vmem [resolvable:$true] %s281
        %284 = dma.hbm_to_vmem [thread:$0]  %s271, 16, %s282, %s273
        %s285 = sadd.s32 %s185, 6
        %s286 = sld [smem:[#allocation5 + %s285]]
        %s287 = smul.addr %s286, 16
        %s288 = scalar_lea.hbm %s1, %s287
        %s289 = scalar_lea.vmem [#allocation2], 6
        %s290 = scalar_lea.sflag [#allocation3], 6
        // Predicated region
        $region65: #{tpu_custom_call.1} parent=31 // pred_check
          _
        $region66: #{tpu_custom_call.1} parent=31 // pred_check_branch
          %292 = sbr.rel target = $region68
        $region67: #{tpu_custom_call.1} parent=31 // pred_region
          %293 = sst [smem:[#allocation14]] [#allocation27]
          %294 = sst [smem:[#allocation15]] [#allocation26]
        $region68: #{tpu_custom_call.1} parent=31 // pred_fallthru
          _
        %296 = shalt.err (0)
        %s298 = sshll.u32 %s289, 4
        %s299 = int_to_ptr.vmem [resolvable:$true] %s298
        %301 = dma.hbm_to_vmem [thread:$0]  %s288, 16, %s299, %s290
        %s302 = sadd.s32 %s185, 7
        %s303 = sld [smem:[#allocation5 + %s302]]
        %s304 = smul.addr %s303, 16
        %s305 = scalar_lea.hbm %s1, %s304
        %s306 = scalar_lea.vmem [#allocation2], 7
        %s307 = scalar_lea.sflag [#allocation3], 7
        // Predicated region
        $region69: #{tpu_custom_call.1} parent=31 // pred_check
          _
        $region70: #{tpu_custom_call.1} parent=31 // pred_check_branch
          %309 = sbr.rel target = $region72
        $region71: #{tpu_custom_call.1} parent=31 // pred_region
          %310 = sst [smem:[#allocation14]] [#allocation29]
          %311 = sst [smem:[#allocation15]] [#allocation28]
        $region72: #{tpu_custom_call.1} parent=31 // pred_fallthru
          _
        %313 = shalt.err (0)
        %s315 = sshll.u32 %s306, 4
        %s316 = int_to_ptr.vmem [resolvable:$true] %s315
        %318 = dma.hbm_to_vmem [thread:$0]  %s305, 16, %s316, %s307
        %s319 = smul.u32 1, 1
        %s320 = sshll.u32 %s319, 4
        %321 = dma.done [#allocation3], %s320
        %s322 = sshll.u32 %s319, 4
        %323 = dma.done %s205, %s322
        %s324 = sshll.u32 %s319, 4
        %325 = dma.done %s222, %s324
        %s326 = sshll.u32 %s319, 4
        %327 = dma.done %s239, %s326
        %s328 = sshll.u32 %s319, 4
        %329 = dma.done %s256, %s328
        %s330 = sshll.u32 %s319, 4
        %331 = dma.done %s273, %s330
        %s332 = sshll.u32 %s319, 4
        %333 = dma.done %s290, %s332
        %s334 = sshll.u32 %s319, 4
        %335 = dma.done %s307, %s334
        %v336 = vld [vmem:[#allocation2] sm:$0xff]
        %v337 = vld [vmem:[#allocation6] sm:$0xff]
        %v338 = vld [vmem:[#allocation6 + $0x8] sm:$0xff]
        %v339 = vld [vmem:[#allocation6 + $0x10] sm:$0xff]
        %v340 = vld [vmem:[#allocation6 + $0x18] sm:$0xff]
        %vm341 = vcmask 261120
        %v343 = vsel %vm341, 0.0, 0
        %345 = vmatprep.subr.mxu0 0.0
        %346 = vmatpush1.msra.mxu0 0.0
        %347 = vmatprep.subr.mxu0 0.0
        %348 = vmatpush1.msra.mxu0 0.0
        %349 = vmatprep.subr.mxu0 0.0
        %350 = vmatpush1.msra.mxu0 0.0
        %351 = vmatprep.subr.mxu0 0.0
        %352 = vmatpush1.msra.mxu0 0.0
        %353 = vmatprep.subr.mxu0 0.0
        %354 = vmatpush1.msra.mxu0 0.0
        %355 = vmatprep.subr.mxu0 0.0
        %356 = vmatpush1.msra.mxu0 0.0
        %357 = vmatprep.subr.mxu0 0.0
        %358 = vmatpush1.msra.mxu0 0.0
        %359 = vmatprep.subr.mxu0 0.0
        %360 = vmatpush1.msra.mxu0 0.0
        %361 = vmatprep.subr.mxu0 0.0
        %362 = vmatpush1.msra.mxu0 0.0
        %363 = vmatprep.subr.mxu0 0.0
        %364 = vmatpush1.msra.mxu0 0.0
        %365 = vmatprep.subr.mxu0 0.0
        %366 = vmatpush1.msra.mxu0 0.0
        %367 = vmatprep.subr.mxu0 0.0
        %368 = vmatpush1.msra.mxu0 0.0
        %369 = vmatprep.subr.mxu0 0.0
        %370 = vmatpush1.msra.mxu0 %v340
        %371 = vmatprep.subr.mxu0 0.0
        %372 = vmatpush1.msra.mxu0 %v339
        %373 = vmatprep.subr.mxu0 0.0
        %374 = vmatpush1.msra.mxu0 %v338
        %375 = vmatprep.subr.mxu0 0.0
        %376 = vmatpush1.msra.mxu0 %v337
        %377 = vmatprep.subr.mxu0 0.0
        %378 = vmatpush2.msra.mxu0 0.0
        %379 = vmatprep.subr.mxu0 0.0
        %380 = vmatpush2.msra.mxu0 0.0
        %381 = vmatprep.subr.mxu0 0.0
        %382 = vmatpush2.msra.mxu0 0.0
        %383 = vmatprep.subr.mxu0 0.0
        %384 = vmatpush2.msra.mxu0 0.0
        %385 = vmatprep.subr.mxu0 0.0
        %386 = vmatpush2.msra.mxu0 0.0
        %387 = vmatprep.subr.mxu0 0.0
        %388 = vmatpush2.msra.mxu0 0.0
        %389 = vmatprep.subr.mxu0 0.0
        %390 = vmatpush2.msra.mxu0 0.0
        %391 = vmatprep.subr.mxu0 0.0
        %392 = vmatpush2.msra.mxu0 0.0
        %393 = vmatprep.subr.mxu0 0.0
        %394 = vmatpush2.msra.mxu0 0.0
        %395 = vmatprep.subr.mxu0 0.0
        %396 = vmatpush2.msra.mxu0 0.0
        %397 = vmatprep.subr.mxu0 0.0
        %398 = vmatpush2.msra.mxu0 0.0
        %399 = vmatprep.subr.mxu0 0.0
        %400 = vmatpush2.msra.mxu0 0.0
        %401 = vmatprep.subr.mxu0 0.0
        %402 = vmatpush2.msra.mxu0 0.0
        %403 = vmatprep.subr.mxu0 0.0
        %404 = vmatpush2.msra.mxu0 0.0
        %405 = vmatprep.subr.mxu0 0.0
        %406 = vmatpush2.msra.mxu0 0.0
        %407 = vmatprep.subr.mxu0 0.0
        %408 = vmatpush2.msra.mxu0 0.0
        %409 = vmatprep.mubr.f32.mxu0 0.0
        %410 = vmatmul.mubr.f32.gmra.mxu0 %v343
        %v411 = vpop.f32.mrf.mxu0
        %v412 = vadd.f32 0.0, %v411
        %v413 = vpop.f32.mrf.mxu0
        %414 = vdwg.mxu0
        %v415 = vadd.f32 %v336, %v412
        %v416 = vxor.u32 %v415, 2147483648
        %v417 = vmul.f32 %v416, 1.442695
        %v418 = vpow.pop %v417
        %v419 = vadd.f32 %v418, 1.0
        %v420 = vrcp.pop %v419
        %v421 = vmul.f32 1.0, %v420
        %v422 = vmul.f32 %v421, 2.0
        %v423 = vsub.f32 %v422, 1.0
        %v424 = vmul.f32 %v421, 0.0
        %426 = vrot.lane.b32.xlu0 %v423, 64
        %v427 = vpop.permute.xlu0 %426
        %v429 = vmul.f32 %v421, %v427
        %431 = vrot.lane.b32.xlu0 %v429, 32
        %v432 = vpop.permute.xlu0 %431
        %v434 = vadd.f32 %v424, %v432
        %v435 = vtanh.pop %v434
        %437 = vrot.lane.b32.xlu0 %v435, 64
        %v438 = vpop.permute.xlu0 %437
        %v440 = vmul.f32 %v421, %v438
        %442 = vrot.lane.b32.xlu0 %v440, 32
        %v443 = vpop.permute.xlu0 %442
        %v444 = vsel %vm341, %v443, 0
        %446 = vmatprep.subr.mxu0 0.0
        %447 = vmatpush1.msra.mxu0 0.0
        %448 = vmatprep.subr.mxu0 0.0
        %449 = vmatpush1.msra.mxu0 0.0
        %450 = vmatprep.subr.mxu0 0.0
        %451 = vmatpush1.msra.mxu0 0.0
        %452 = vmatprep.subr.mxu0 0.0
        %453 = vmatpush1.msra.mxu0 0.0
        %454 = vmatprep.subr.mxu0 0.0
        %455 = vmatpush1.msra.mxu0 0.0
        %456 = vmatprep.subr.mxu0 0.0
        %457 = vmatpush1.msra.mxu0 0.0
        %458 = vmatprep.subr.mxu0 0.0
        %459 = vmatpush1.msra.mxu0 0.0
        %460 = vmatprep.subr.mxu0 0.0
        %461 = vmatpush1.msra.mxu0 0.0
        %462 = vmatprep.subr.mxu0 0.0
        %463 = vmatpush1.msra.mxu0 0.0
        %464 = vmatprep.subr.mxu0 0.0
        %465 = vmatpush1.msra.mxu0 0.0
        %466 = vmatprep.subr.mxu0 0.0
        %467 = vmatpush1.msra.mxu0 0.0
        %468 = vmatprep.subr.mxu0 0.0
        %469 = vmatpush1.msra.mxu0 0.0
        %470 = vmatprep.subr.mxu0 0.0
        %471 = vmatpush1.msra.mxu0 %v340
        %472 = vmatprep.subr.mxu0 0.0
        %473 = vmatpush1.msra.mxu0 %v339
        %474 = vmatprep.subr.mxu0 0.0
        %475 = vmatpush1.msra.mxu0 %v338
        %476 = vmatprep.subr.mxu0 0.0
        %477 = vmatpush1.msra.mxu0 %v337
        %478 = vmatprep.subr.mxu0 0.0
        %479 = vmatpush2.msra.mxu0 0.0
        %480 = vmatprep.subr.mxu0 0.0
        %481 = vmatpush2.msra.mxu0 0.0
        %482 = vmatprep.subr.mxu0 0.0
        %483 = vmatpush2.msra.mxu0 0.0
        %484 = vmatprep.subr.mxu0 0.0
        %485 = vmatpush2.msra.mxu0 0.0
        %486 = vmatprep.subr.mxu0 0.0
        %487 = vmatpush2.msra.mxu0 0.0
        %488 = vmatprep.subr.mxu0 0.0
        %489 = vmatpush2.msra.mxu0 0.0
        %490 = vmatprep.subr.mxu0 0.0
        %491 = vmatpush2.msra.mxu0 0.0
        %492 = vmatprep.subr.mxu0 0.0
        %493 = vmatpush2.msra.mxu0 0.0
        %494 = vmatprep.subr.mxu0 0.0
        %495 = vmatpush2.msra.mxu0 0.0
        %496 = vmatprep.subr.mxu0 0.0
        %497 = vmatpush2.msra.mxu0 0.0
        %498 = vmatprep.subr.mxu0 0.0
        %499 = vmatpush2.msra.mxu0 0.0
        %500 = vmatprep.subr.mxu0 0.0
        %501 = vmatpush2.msra.mxu0 0.0
        %502 = vmatprep.subr.mxu0 0.0
        %503 = vmatpush2.msra.mxu0 0.0
        %504 = vmatprep.subr.mxu0 0.0
        %505 = vmatpush2.msra.mxu0 0.0
        %506 = vmatprep.subr.mxu0 0.0
        %507 = vmatpush2.msra.mxu0 0.0
        %508 = vmatprep.subr.mxu0 0.0
        %509 = vmatpush2.msra.mxu0 0.0
        %510 = vmatprep.mubr.f32.mxu0 0.0
        %511 = vmatmul.mubr.f32.gmra.mxu0 %v444
        %v512 = vpop.f32.mrf.mxu0
        %v513 = vadd.f32 0.0, %v512
        %v514 = vpop.f32.mrf.mxu0
        %515 = vdwg.mxu0
        %v517 = vrot.slane %v513, 7
        %v519 = vadd.f32 %v336, %v517
        %v520 = vxor.u32 %v519, 2147483648
        %v521 = vmul.f32 %v520, 1.442695
        %v522 = vpow.pop %v521
        %v523 = vadd.f32 %v522, 1.0
        %v524 = vrcp.pop %v523
        %v525 = vmul.f32 1.0, %v524
        %v526 = vmul.f32 %v525, 2.0
        %v527 = vsub.f32 %v526, 1.0
        %v529 = vrot.slane %v434, 7
        %v531 = vmul.f32 %v525, %v529
        %533 = vrot.lane.b32.xlu0 %v527, 64
        %v534 = vpop.permute.xlu0 %533
        %v536 = vmul.f32 %v525, %v534
        %538 = vrot.lane.b32.xlu0 %v536, 32
        %v539 = vpop.permute.xlu0 %538
        %v541 = vadd.f32 %v531, %v539
        %v542 = vtanh.pop %v541
        %544 = vrot.lane.b32.xlu0 %v542, 64
        %v545 = vpop.permute.xlu0 %544
        %v547 = vmul.f32 %v525, %v545
        %v549 = vrot.slane %v547, 1
        %550 = vrot.lane.b32.xlu0 %v549, 32
        %v551 = vpop.permute.xlu0 %550
        %v552 = vsel %vm341, %v551, 0
        %554 = vmatprep.subr.mxu0 0.0
        %555 = vmatpush1.msra.mxu0 0.0
        %556 = vmatprep.subr.mxu0 0.0
        %557 = vmatpush1.msra.mxu0 0.0
        %558 = vmatprep.subr.mxu0 0.0
        %559 = vmatpush1.msra.mxu0 0.0
        %560 = vmatprep.subr.mxu0 0.0
        %561 = vmatpush1.msra.mxu0 0.0
        %562 = vmatprep.subr.mxu0 0.0
        %563 = vmatpush1.msra.mxu0 0.0
        %564 = vmatprep.subr.mxu0 0.0
        %565 = vmatpush1.msra.mxu0 0.0
        %566 = vmatprep.subr.mxu0 0.0
        %567 = vmatpush1.msra.mxu0 0.0
        %568 = vmatprep.subr.mxu0 0.0
        %569 = vmatpush1.msra.mxu0 0.0
        %570 = vmatprep.subr.mxu0 0.0
        %571 = vmatpush1.msra.mxu0 0.0
        %572 = vmatprep.subr.mxu0 0.0
        %573 = vmatpush1.msra.mxu0 0.0
        %574 = vmatprep.subr.mxu0 0.0
        %575 = vmatpush1.msra.mxu0 0.0
        %576 = vmatprep.subr.mxu0 0.0
        %577 = vmatpush1.msra.mxu0 0.0
        %578 = vmatprep.subr.mxu0 0.0
        %579 = vmatpush1.msra.mxu0 %v340
        %580 = vmatprep.subr.mxu0 0.0
        %581 = vmatpush1.msra.mxu0 %v339
        %582 = vmatprep.subr.mxu0 0.0
        %583 = vmatpush1.msra.mxu0 %v338
        %584 = vmatprep.subr.mxu0 0.0
        %585 = vmatpush1.msra.mxu0 %v337
        %586 = vmatprep.subr.mxu0 0.0
        %587 = vmatpush2.msra.mxu0 0.0
        %588 = vmatprep.subr.mxu0 0.0
        %589 = vmatpush2.msra.mxu0 0.0
        %590 = vmatprep.subr.mxu0 0.0
        %591 = vmatpush2.msra.mxu0 0.0
        %592 = vmatprep.subr.mxu0 0.0
        %593 = vmatpush2.msra.mxu0 0.0
        %594 = vmatprep.subr.mxu0 0.0
        %595 = vmatpush2.msra.mxu0 0.0
        %596 = vmatprep.subr.mxu0 0.0
        %597 = vmatpush2.msra.mxu0 0.0
        %598 = vmatprep.subr.mxu0 0.0
        %599 = vmatpush2.msra.mxu0 0.0
        %600 = vmatprep.subr.mxu0 0.0
        %601 = vmatpush2.msra.mxu0 0.0
        %602 = vmatprep.subr.mxu0 0.0
        %603 = vmatpush2.msra.mxu0 0.0
        %604 = vmatprep.subr.mxu0 0.0
        %605 = vmatpush2.msra.mxu0 0.0
        %606 = vmatprep.subr.mxu0 0.0
        %607 = vmatpush2.msra.mxu0 0.0
        %608 = vmatprep.subr.mxu0 0.0
        %609 = vmatpush2.msra.mxu0 0.0
        %610 = vmatprep.subr.mxu0 0.0
        %611 = vmatpush2.msra.mxu0 0.0
        %612 = vmatprep.subr.mxu0 0.0
        %613 = vmatpush2.msra.mxu0 0.0
        %614 = vmatprep.subr.mxu0 0.0
        %615 = vmatpush2.msra.mxu0 0.0
        %616 = vmatprep.subr.mxu0 0.0
        %617 = vmatpush2.msra.mxu0 0.0
        %618 = vmatprep.mubr.f32.mxu0 0.0
        %619 = vmatmul.mubr.f32.gmra.mxu0 %v552
        %v620 = vpop.f32.mrf.mxu0
        %v621 = vadd.f32 0.0, %v620
        %v622 = vpop.f32.mrf.mxu0
        %623 = vdwg.mxu0
        %v625 = vrot.slane %v621, 6
        %v627 = vadd.f32 %v336, %v625
        %v628 = vxor.u32 %v627, 2147483648
        %v629 = vmul.f32 %v628, 1.442695
        %v630 = vpow.pop %v629
        %v631 = vadd.f32 %v630, 1.0
        %v632 = vrcp.pop %v631
        %v633 = vmul.f32 1.0, %v632
        %v634 = vmul.f32 %v633, 2.0
        %v635 = vsub.f32 %v634, 1.0
        %v637 = vrot.slane %v541, 7
        %v639 = vmul.f32 %v633, %v637
        %641 = vrot.lane.b32.xlu0 %v635, 64
        %v642 = vpop.permute.xlu0 %641
        %v644 = vmul.f32 %v633, %v642
        %646 = vrot.lane.b32.xlu0 %v644, 32
        %v647 = vpop.permute.xlu0 %646
        %v649 = vadd.f32 %v639, %v647
        %v650 = vtanh.pop %v649
        %652 = vrot.lane.b32.xlu0 %v650, 64
        %v653 = vpop.permute.xlu0 %652
        %v655 = vmul.f32 %v633, %v653
        %v657 = vrot.slane %v655, 2
        %658 = vrot.lane.b32.xlu0 %v657, 32
        %v659 = vpop.permute.xlu0 %658
        %v660 = vsel %vm341, %v659, 0
        %662 = vmatprep.subr.mxu0 0.0
        %663 = vmatpush1.msra.mxu0 0.0
        %664 = vmatprep.subr.mxu0 0.0
        %665 = vmatpush1.msra.mxu0 0.0
        %666 = vmatprep.subr.mxu0 0.0
        %667 = vmatpush1.msra.mxu0 0.0
        %668 = vmatprep.subr.mxu0 0.0
        %669 = vmatpush1.msra.mxu0 0.0
        %670 = vmatprep.subr.mxu0 0.0
        %671 = vmatpush1.msra.mxu0 0.0
        %672 = vmatprep.subr.mxu0 0.0
        %673 = vmatpush1.msra.mxu0 0.0
        %674 = vmatprep.subr.mxu0 0.0
        %675 = vmatpush1.msra.mxu0 0.0
        %676 = vmatprep.subr.mxu0 0.0
        %677 = vmatpush1.msra.mxu0 0.0
        %678 = vmatprep.subr.mxu0 0.0
        %679 = vmatpush1.msra.mxu0 0.0
        %680 = vmatprep.subr.mxu0 0.0
        %681 = vmatpush1.msra.mxu0 0.0
        %682 = vmatprep.subr.mxu0 0.0
        %683 = vmatpush1.msra.mxu0 0.0
        %684 = vmatprep.subr.mxu0 0.0
        %685 = vmatpush1.msra.mxu0 0.0
        %686 = vmatprep.subr.mxu0 0.0
        %687 = vmatpush1.msra.mxu0 %v340
        %688 = vmatprep.subr.mxu0 0.0
        %689 = vmatpush1.msra.mxu0 %v339
        %690 = vmatprep.subr.mxu0 0.0
        %691 = vmatpush1.msra.mxu0 %v338
        %692 = vmatprep.subr.mxu0 0.0
        %693 = vmatpush1.msra.mxu0 %v337
        %694 = vmatprep.subr.mxu0 0.0
        %695 = vmatpush2.msra.mxu0 0.0
        %696 = vmatprep.subr.mxu0 0.0
        %697 = vmatpush2.msra.mxu0 0.0
        %698 = vmatprep.subr.mxu0 0.0
        %699 = vmatpush2.msra.mxu0 0.0
        %700 = vmatprep.subr.mxu0 0.0
        %701 = vmatpush2.msra.mxu0 0.0
        %702 = vmatprep.subr.mxu0 0.0
        %703 = vmatpush2.msra.mxu0 0.0
        %704 = vmatprep.subr.mxu0 0.0
        %705 = vmatpush2.msra.mxu0 0.0
        %706 = vmatprep.subr.mxu0 0.0
        %707 = vmatpush2.msra.mxu0 0.0
        %708 = vmatprep.subr.mxu0 0.0
        %709 = vmatpush2.msra.mxu0 0.0
        %710 = vmatprep.subr.mxu0 0.0
        %711 = vmatpush2.msra.mxu0 0.0
        %712 = vmatprep.subr.mxu0 0.0
        %713 = vmatpush2.msra.mxu0 0.0
        %714 = vmatprep.subr.mxu0 0.0
        %715 = vmatpush2.msra.mxu0 0.0
        %716 = vmatprep.subr.mxu0 0.0
        %717 = vmatpush2.msra.mxu0 0.0
        %718 = vmatprep.subr.mxu0 0.0
        %719 = vmatpush2.msra.mxu0 0.0
        %720 = vmatprep.subr.mxu0 0.0
        %721 = vmatpush2.msra.mxu0 0.0
        %722 = vmatprep.subr.mxu0 0.0
        %723 = vmatpush2.msra.mxu0 0.0
        %724 = vmatprep.subr.mxu0 0.0
        %725 = vmatpush2.msra.mxu0 0.0
        %726 = vmatprep.mubr.f32.mxu0 0.0
        %727 = vmatmul.mubr.f32.gmra.mxu0 %v660
        %v728 = vpop.f32.mrf.mxu0
        %v729 = vadd.f32 0.0, %v728
        %v730 = vpop.f32.mrf.mxu0
        %731 = vdwg.mxu0
        %v733 = vrot.slane %v729, 5
        %v735 = vadd.f32 %v336, %v733
        %v736 = vxor.u32 %v735, 2147483648
        %v737 = vmul.f32 %v736, 1.442695
        %v738 = vpow.pop %v737
        %v739 = vadd.f32 %v738, 1.0
        %v740 = vrcp.pop %v739
        %v741 = vmul.f32 1.0, %v740
        %v742 = vmul.f32 %v741, 2.0
        %v743 = vsub.f32 %v742, 1.0
        %v745 = vrot.slane %v649, 7
        %v747 = vmul.f32 %v741, %v745
        %749 = vrot.lane.b32.xlu0 %v743, 64
        %v750 = vpop.permute.xlu0 %749
        %v752 = vmul.f32 %v741, %v750
        %754 = vrot.lane.b32.xlu0 %v752, 32
        %v755 = vpop.permute.xlu0 %754
        %v757 = vadd.f32 %v747, %v755
        %v758 = vtanh.pop %v757
        %760 = vrot.lane.b32.xlu0 %v758, 64
        %v761 = vpop.permute.xlu0 %760
        %v763 = vmul.f32 %v741, %v761
        %v765 = vrot.slane %v763, 3
        %766 = vrot.lane.b32.xlu0 %v765, 32
        %v767 = vpop.permute.xlu0 %766
        %v768 = vsel %vm341, %v767, 0
        %770 = vmatprep.subr.mxu0 0.0
        %771 = vmatpush1.msra.mxu0 0.0
        %772 = vmatprep.subr.mxu0 0.0
        %773 = vmatpush1.msra.mxu0 0.0
        %774 = vmatprep.subr.mxu0 0.0
        %775 = vmatpush1.msra.mxu0 0.0
        %776 = vmatprep.subr.mxu0 0.0
        %777 = vmatpush1.msra.mxu0 0.0
        %778 = vmatprep.subr.mxu0 0.0
        %779 = vmatpush1.msra.mxu0 0.0
        %780 = vmatprep.subr.mxu0 0.0
        %781 = vmatpush1.msra.mxu0 0.0
        %782 = vmatprep.subr.mxu0 0.0
        %783 = vmatpush1.msra.mxu0 0.0
        %784 = vmatprep.subr.mxu0 0.0
        %785 = vmatpush1.msra.mxu0 0.0
        %786 = vmatprep.subr.mxu0 0.0
        %787 = vmatpush1.msra.mxu0 0.0
        %788 = vmatprep.subr.mxu0 0.0
        %789 = vmatpush1.msra.mxu0 0.0
        %790 = vmatprep.subr.mxu0 0.0
        %791 = vmatpush1.msra.mxu0 0.0
        %792 = vmatprep.subr.mxu0 0.0
        %793 = vmatpush1.msra.mxu0 0.0
        %794 = vmatprep.subr.mxu0 0.0
        %795 = vmatpush1.msra.mxu0 %v340
        %796 = vmatprep.subr.mxu0 0.0
        %797 = vmatpush1.msra.mxu0 %v339
        %798 = vmatprep.subr.mxu0 0.0
        %799 = vmatpush1.msra.mxu0 %v338
        %800 = vmatprep.subr.mxu0 0.0
        %801 = vmatpush1.msra.mxu0 %v337
        %802 = vmatprep.subr.mxu0 0.0
        %803 = vmatpush2.msra.mxu0 0.0
        %804 = vmatprep.subr.mxu0 0.0
        %805 = vmatpush2.msra.mxu0 0.0
        %806 = vmatprep.subr.mxu0 0.0
        %807 = vmatpush2.msra.mxu0 0.0
        %808 = vmatprep.subr.mxu0 0.0
        %809 = vmatpush2.msra.mxu0 0.0
        %810 = vmatprep.subr.mxu0 0.0
        %811 = vmatpush2.msra.mxu0 0.0
        %812 = vmatprep.subr.mxu0 0.0
        %813 = vmatpush2.msra.mxu0 0.0
        %814 = vmatprep.subr.mxu0 0.0
        %815 = vmatpush2.msra.mxu0 0.0
        %816 = vmatprep.subr.mxu0 0.0
        %817 = vmatpush2.msra.mxu0 0.0
        %818 = vmatprep.subr.mxu0 0.0
        %819 = vmatpush2.msra.mxu0 0.0
        %820 = vmatprep.subr.mxu0 0.0
        %821 = vmatpush2.msra.mxu0 0.0
        %822 = vmatprep.subr.mxu0 0.0
        %823 = vmatpush2.msra.mxu0 0.0
        %824 = vmatprep.subr.mxu0 0.0
        %825 = vmatpush2.msra.mxu0 0.0
        %826 = vmatprep.subr.mxu0 0.0
        %827 = vmatpush2.msra.mxu0 0.0
        %828 = vmatprep.subr.mxu0 0.0
        %829 = vmatpush2.msra.mxu0 0.0
        %830 = vmatprep.subr.mxu0 0.0
        %831 = vmatpush2.msra.mxu0 0.0
        %832 = vmatprep.subr.mxu0 0.0
        %833 = vmatpush2.msra.mxu0 0.0
        %834 = vmatprep.mubr.f32.mxu0 0.0
        %835 = vmatmul.mubr.f32.gmra.mxu0 %v768
        %v836 = vpop.f32.mrf.mxu0
        %v837 = vadd.f32 0.0, %v836
        %v838 = vpop.f32.mrf.mxu0
        %839 = vdwg.mxu0
        %v841 = vrot.slane %v837, 4
        %v843 = vadd.f32 %v336, %v841
        %v844 = vxor.u32 %v843, 2147483648
        %v845 = vmul.f32 %v844, 1.442695
        %v846 = vpow.pop %v845
        %v847 = vadd.f32 %v846, 1.0
        %v848 = vrcp.pop %v847
        %v849 = vmul.f32 1.0, %v848
        %v850 = vmul.f32 %v849, 2.0
        %v851 = vsub.f32 %v850, 1.0
        %v853 = vrot.slane %v757, 7
        %v855 = vmul.f32 %v849, %v853
        %857 = vrot.lane.b32.xlu0 %v851, 64
        %v858 = vpop.permute.xlu0 %857
        %v860 = vmul.f32 %v849, %v858
        %862 = vrot.lane.b32.xlu0 %v860, 32
        %v863 = vpop.permute.xlu0 %862
        %v865 = vadd.f32 %v855, %v863
        %v866 = vtanh.pop %v865
        %868 = vrot.lane.b32.xlu0 %v866, 64
        %v869 = vpop.permute.xlu0 %868
        %v871 = vmul.f32 %v849, %v869
        %v873 = vrot.slane %v871, 4
        %874 = vrot.lane.b32.xlu0 %v873, 32
        %v875 = vpop.permute.xlu0 %874
        %v876 = vsel %vm341, %v875, 0
        %878 = vmatprep.subr.mxu0 0.0
        %879 = vmatpush1.msra.mxu0 0.0
        %880 = vmatprep.subr.mxu0 0.0
        %881 = vmatpush1.msra.mxu0 0.0
        %882 = vmatprep.subr.mxu0 0.0
        %883 = vmatpush1.msra.mxu0 0.0
        %884 = vmatprep.subr.mxu0 0.0
        %885 = vmatpush1.msra.mxu0 0.0
        %886 = vmatprep.subr.mxu0 0.0
        %887 = vmatpush1.msra.mxu0 0.0
        %888 = vmatprep.subr.mxu0 0.0
        %889 = vmatpush1.msra.mxu0 0.0
        %890 = vmatprep.subr.mxu0 0.0
        %891 = vmatpush1.msra.mxu0 0.0
        %892 = vmatprep.subr.mxu0 0.0
        %893 = vmatpush1.msra.mxu0 0.0
        %894 = vmatprep.subr.mxu0 0.0
        %895 = vmatpush1.msra.mxu0 0.0
        %896 = vmatprep.subr.mxu0 0.0
        %897 = vmatpush1.msra.mxu0 0.0
        %898 = vmatprep.subr.mxu0 0.0
        %899 = vmatpush1.msra.mxu0 0.0
        %900 = vmatprep.subr.mxu0 0.0
        %901 = vmatpush1.msra.mxu0 0.0
        %902 = vmatprep.subr.mxu0 0.0
        %903 = vmatpush1.msra.mxu0 %v340
        %904 = vmatprep.subr.mxu0 0.0
        %905 = vmatpush1.msra.mxu0 %v339
        %906 = vmatprep.subr.mxu0 0.0
        %907 = vmatpush1.msra.mxu0 %v338
        %908 = vmatprep.subr.mxu0 0.0
        %909 = vmatpush1.msra.mxu0 %v337
        %910 = vmatprep.subr.mxu0 0.0
        %911 = vmatpush2.msra.mxu0 0.0
        %912 = vmatprep.subr.mxu0 0.0
        %913 = vmatpush2.msra.mxu0 0.0
        %914 = vmatprep.subr.mxu0 0.0
        %915 = vmatpush2.msra.mxu0 0.0
        %916 = vmatprep.subr.mxu0 0.0
        %917 = vmatpush2.msra.mxu0 0.0
        %918 = vmatprep.subr.mxu0 0.0
        %919 = vmatpush2.msra.mxu0 0.0
        %920 = vmatprep.subr.mxu0 0.0
        %921 = vmatpush2.msra.mxu0 0.0
        %922 = vmatprep.subr.mxu0 0.0
        %923 = vmatpush2.msra.mxu0 0.0
        %924 = vmatprep.subr.mxu0 0.0
        %925 = vmatpush2.msra.mxu0 0.0
        %926 = vmatprep.subr.mxu0 0.0
        %927 = vmatpush2.msra.mxu0 0.0
        %928 = vmatprep.subr.mxu0 0.0
        %929 = vmatpush2.msra.mxu0 0.0
        %930 = vmatprep.subr.mxu0 0.0
        %931 = vmatpush2.msra.mxu0 0.0
        %932 = vmatprep.subr.mxu0 0.0
        %933 = vmatpush2.msra.mxu0 0.0
        %934 = vmatprep.subr.mxu0 0.0
        %935 = vmatpush2.msra.mxu0 0.0
        %936 = vmatprep.subr.mxu0 0.0
        %937 = vmatpush2.msra.mxu0 0.0
        %938 = vmatprep.subr.mxu0 0.0
        %939 = vmatpush2.msra.mxu0 0.0
        %940 = vmatprep.subr.mxu0 0.0
        %941 = vmatpush2.msra.mxu0 0.0
        %942 = vmatprep.mubr.f32.mxu0 0.0
        %943 = vmatmul.mubr.f32.gmra.mxu0 %v876
        %v944 = vpop.f32.mrf.mxu0
        %v945 = vadd.f32 0.0, %v944
        %v946 = vpop.f32.mrf.mxu0
        %947 = vdwg.mxu0
        %v949 = vrot.slane %v945, 3
        %v951 = vadd.f32 %v336, %v949
        %v952 = vxor.u32 %v951, 2147483648
        %v953 = vmul.f32 %v952, 1.442695
        %v954 = vpow.pop %v953
        %v955 = vadd.f32 %v954, 1.0
        %v956 = vrcp.pop %v955
        %v957 = vmul.f32 1.0, %v956
        %v958 = vmul.f32 %v957, 2.0
        %v959 = vsub.f32 %v958, 1.0
        %v961 = vrot.slane %v865, 7
        %v963 = vmul.f32 %v957, %v961
        %965 = vrot.lane.b32.xlu0 %v959, 64
        %v966 = vpop.permute.xlu0 %965
        %v968 = vmul.f32 %v957, %v966
        %970 = vrot.lane.b32.xlu0 %v968, 32
        %v971 = vpop.permute.xlu0 %970
        %v973 = vadd.f32 %v963, %v971
        %v974 = vtanh.pop %v973
        %976 = vrot.lane.b32.xlu0 %v974, 64
        %v977 = vpop.permute.xlu0 %976
        %v979 = vmul.f32 %v957, %v977
        %v981 = vrot.slane %v979, 5
        %982 = vrot.lane.b32.xlu0 %v981, 32
        %v983 = vpop.permute.xlu0 %982
        %v984 = vsel %vm341, %v983, 0
        %986 = vmatprep.subr.mxu0 0.0
        %987 = vmatpush1.msra.mxu0 0.0
        %988 = vmatprep.subr.mxu0 0.0
        %989 = vmatpush1.msra.mxu0 0.0
        %990 = vmatprep.subr.mxu0 0.0
        %991 = vmatpush1.msra.mxu0 0.0
        %992 = vmatprep.subr.mxu0 0.0
        %993 = vmatpush1.msra.mxu0 0.0
        %994 = vmatprep.subr.mxu0 0.0
        %995 = vmatpush1.msra.mxu0 0.0
        %996 = vmatprep.subr.mxu0 0.0
        %997 = vmatpush1.msra.mxu0 0.0
        %998 = vmatprep.subr.mxu0 0.0
        %999 = vmatpush1.msra.mxu0 0.0
        %1000 = vmatprep.subr.mxu0 0.0
        %1001 = vmatpush1.msra.mxu0 0.0
        %1002 = vmatprep.subr.mxu0 0.0
        %1003 = vmatpush1.msra.mxu0 0.0
        %1004 = vmatprep.subr.mxu0 0.0
        %1005 = vmatpush1.msra.mxu0 0.0
        %1006 = vmatprep.subr.mxu0 0.0
        %1007 = vmatpush1.msra.mxu0 0.0
        %1008 = vmatprep.subr.mxu0 0.0
        %1009 = vmatpush1.msra.mxu0 0.0
        %1010 = vmatprep.subr.mxu0 0.0
        %1011 = vmatpush1.msra.mxu0 %v340
        %1012 = vmatprep.subr.mxu0 0.0
        %1013 = vmatpush1.msra.mxu0 %v339
        %1014 = vmatprep.subr.mxu0 0.0
        %1015 = vmatpush1.msra.mxu0 %v338
        %1016 = vmatprep.subr.mxu0 0.0
        %1017 = vmatpush1.msra.mxu0 %v337
        %1018 = vmatprep.subr.mxu0 0.0
        %1019 = vmatpush2.msra.mxu0 0.0
        %1020 = vmatprep.subr.mxu0 0.0
        %1021 = vmatpush2.msra.mxu0 0.0
        %1022 = vmatprep.subr.mxu0 0.0
        %1023 = vmatpush2.msra.mxu0 0.0
        %1024 = vmatprep.subr.mxu0 0.0
        %1025 = vmatpush2.msra.mxu0 0.0
        %1026 = vmatprep.subr.mxu0 0.0
        %1027 = vmatpush2.msra.mxu0 0.0
        %1028 = vmatprep.subr.mxu0 0.0
        %1029 = vmatpush2.msra.mxu0 0.0
        %1030 = vmatprep.subr.mxu0 0.0
        %1031 = vmatpush2.msra.mxu0 0.0
        %1032 = vmatprep.subr.mxu0 0.0
        %1033 = vmatpush2.msra.mxu0 0.0
        %1034 = vmatprep.subr.mxu0 0.0
        %1035 = vmatpush2.msra.mxu0 0.0
        %1036 = vmatprep.subr.mxu0 0.0
        %1037 = vmatpush2.msra.mxu0 0.0
        %1038 = vmatprep.subr.mxu0 0.0
        %1039 = vmatpush2.msra.mxu0 0.0
        %1040 = vmatprep.subr.mxu0 0.0
        %1041 = vmatpush2.msra.mxu0 0.0
        %1042 = vmatprep.subr.mxu0 0.0
        %1043 = vmatpush2.msra.mxu0 0.0
        %1044 = vmatprep.subr.mxu0 0.0
        %1045 = vmatpush2.msra.mxu0 0.0
        %1046 = vmatprep.subr.mxu0 0.0
        %1047 = vmatpush2.msra.mxu0 0.0
        %1048 = vmatprep.subr.mxu0 0.0
        %1049 = vmatpush2.msra.mxu0 0.0
        %1050 = vmatprep.mubr.f32.mxu0 0.0
        %1051 = vmatmul.mubr.f32.gmra.mxu0 %v984
        %v1052 = vpop.f32.mrf.mxu0
        %v1053 = vadd.f32 0.0, %v1052
        %v1054 = vpop.f32.mrf.mxu0
        %1055 = vdwg.mxu0
        %v1057 = vrot.slane %v1053, 2
        %v1059 = vadd.f32 %v336, %v1057
        %v1060 = vxor.u32 %v1059, 2147483648
        %v1061 = vmul.f32 %v1060, 1.442695
        %v1062 = vpow.pop %v1061
        %v1063 = vadd.f32 %v1062, 1.0
        %v1064 = vrcp.pop %v1063
        %v1065 = vmul.f32 1.0, %v1064
        %v1066 = vmul.f32 %v1065, 2.0
        %v1067 = vsub.f32 %v1066, 1.0
        %v1069 = vrot.slane %v973, 7
        %v1071 = vmul.f32 %v1065, %v1069
        %1073 = vrot.lane.b32.xlu0 %v1067, 64
        %v1074 = vpop.permute.xlu0 %1073
        %v1076 = vmul.f32 %v1065, %v1074
        %1078 = vrot.lane.b32.xlu0 %v1076, 32
        %v1079 = vpop.permute.xlu0 %1078
        %v1081 = vadd.f32 %v1071, %v1079
        %v1082 = vtanh.pop %v1081
        %1084 = vrot.lane.b32.xlu0 %v1082, 64
        %v1085 = vpop.permute.xlu0 %1084
        %v1087 = vmul.f32 %v1065, %v1085
        %v1089 = vrot.slane %v1087, 6
        %1090 = vrot.lane.b32.xlu0 %v1089, 32
        %v1091 = vpop.permute.xlu0 %1090
        %v1092 = vsel %vm341, %v1091, 0
        %1094 = vmatprep.subr.mxu0 0.0
        %1095 = vmatpush1.msra.mxu0 0.0
        %1096 = vmatprep.subr.mxu0 0.0
        %1097 = vmatpush1.msra.mxu0 0.0
        %1098 = vmatprep.subr.mxu0 0.0
        %1099 = vmatpush1.msra.mxu0 0.0
        %1100 = vmatprep.subr.mxu0 0.0
        %1101 = vmatpush1.msra.mxu0 0.0
        %1102 = vmatprep.subr.mxu0 0.0
        %1103 = vmatpush1.msra.mxu0 0.0
        %1104 = vmatprep.subr.mxu0 0.0
        %1105 = vmatpush1.msra.mxu0 0.0
        %1106 = vmatprep.subr.mxu0 0.0
        %1107 = vmatpush1.msra.mxu0 0.0
        %1108 = vmatprep.subr.mxu0 0.0
        %1109 = vmatpush1.msra.mxu0 0.0
        %1110 = vmatprep.subr.mxu0 0.0
        %1111 = vmatpush1.msra.mxu0 0.0
        %1112 = vmatprep.subr.mxu0 0.0
        %1113 = vmatpush1.msra.mxu0 0.0
        %1114 = vmatprep.subr.mxu0 0.0
        %1115 = vmatpush1.msra.mxu0 0.0
        %1116 = vmatprep.subr.mxu0 0.0
        %1117 = vmatpush1.msra.mxu0 0.0
        %1118 = vmatprep.subr.mxu0 0.0
        %1119 = vmatpush1.msra.mxu0 %v340
        %1120 = vmatprep.subr.mxu0 0.0
        %1121 = vmatpush1.msra.mxu0 %v339
        %1122 = vmatprep.subr.mxu0 0.0
        %1123 = vmatpush1.msra.mxu0 %v338
        %1124 = vmatprep.subr.mxu0 0.0
        %1125 = vmatpush1.msra.mxu0 %v337
        %1126 = vmatprep.subr.mxu0 0.0
        %1127 = vmatpush2.msra.mxu0 0.0
        %1128 = vmatprep.subr.mxu0 0.0
        %1129 = vmatpush2.msra.mxu0 0.0
        %1130 = vmatprep.subr.mxu0 0.0
        %1131 = vmatpush2.msra.mxu0 0.0
        %1132 = vmatprep.subr.mxu0 0.0
        %1133 = vmatpush2.msra.mxu0 0.0
        %1134 = vmatprep.subr.mxu0 0.0
        %1135 = vmatpush2.msra.mxu0 0.0
        %1136 = vmatprep.subr.mxu0 0.0
        %1137 = vmatpush2.msra.mxu0 0.0
        %1138 = vmatprep.subr.mxu0 0.0
        %1139 = vmatpush2.msra.mxu0 0.0
        %1140 = vmatprep.subr.mxu0 0.0
        %1141 = vmatpush2.msra.mxu0 0.0
        %1142 = vmatprep.subr.mxu0 0.0
        %1143 = vmatpush2.msra.mxu0 0.0
        %1144 = vmatprep.subr.mxu0 0.0
        %1145 = vmatpush2.msra.mxu0 0.0
        %1146 = vmatprep.subr.mxu0 0.0
        %1147 = vmatpush2.msra.mxu0 0.0
        %1148 = vmatprep.subr.mxu0 0.0
        %1149 = vmatpush2.msra.mxu0 0.0
        %1150 = vmatprep.subr.mxu0 0.0
        %1151 = vmatpush2.msra.mxu0 0.0
        %1152 = vmatprep.subr.mxu0 0.0
        %1153 = vmatpush2.msra.mxu0 0.0
        %1154 = vmatprep.subr.mxu0 0.0
        %1155 = vmatpush2.msra.mxu0 0.0
        %1156 = vmatprep.subr.mxu0 0.0
        %1157 = vmatpush2.msra.mxu0 0.0
        %1158 = vmatprep.mubr.f32.mxu0 0.0
        %1159 = vmatmul.mubr.f32.gmra.mxu0 %v1092
        %v1160 = vpop.f32.mrf.mxu0
        %v1161 = vadd.f32 0.0, %v1160
        %v1162 = vpop.f32.mrf.mxu0
        %1163 = vdwg.mxu0
        %v1165 = vrot.slane %v1161, 1
        %v1167 = vadd.f32 %v336, %v1165
        %v1168 = vxor.u32 %v1167, 2147483648
        %v1169 = vmul.f32 %v1168, 1.442695
        %v1170 = vpow.pop %v1169
        %v1171 = vadd.f32 %v1170, 1.0
        %v1172 = vrcp.pop %v1171
        %v1173 = vmul.f32 1.0, %v1172
        %v1174 = vmul.f32 %v1173, 2.0
        %v1175 = vsub.f32 %v1174, 1.0
        %v1177 = vrot.slane %v1081, 7
        %v1179 = vmul.f32 %v1173, %v1177
        %1181 = vrot.lane.b32.xlu0 %v1175, 64
        %v1182 = vpop.permute.xlu0 %1181
        %v1184 = vmul.f32 %v1173, %v1182
        %1186 = vrot.lane.b32.xlu0 %v1184, 32
        %v1187 = vpop.permute.xlu0 %1186
        %v1189 = vadd.f32 %v1179, %v1187
        %v1190 = vtanh.pop %v1189
        %1192 = vrot.lane.b32.xlu0 %v1190, 64
        %v1193 = vpop.permute.xlu0 %1192
        %v1195 = vmul.f32 %v1173, %v1193
        %vm1196 = vcmask 1040384
        %v1197 = vsel %vm1196, %v440, %v547
        %vm1198 = vcmask 1041408
        %v1199 = vsel %vm1198, %v1197, %v655
        %vm1200 = vcmask 1042432
        %v1201 = vsel %vm1200, %v1199, %v763
        %vm1202 = vcmask 1043456
        %v1203 = vsel %vm1202, %v1201, %v871
        %vm1204 = vcmask 1044480
        %v1205 = vsel %vm1204, %v1203, %v979
        %vm1206 = vcmask 1045504
        %v1207 = vsel %vm1206, %v1205, %v1087
        %vm1208 = vcmask 1046528
        %v1209 = vsel %vm1208, %v1207, %v1195
        %v1210 = vld [vmem:[#allocation9] sm:$0xff]
        %v1211 = vld [vmem:[#allocation9 + $0x8] sm:$0xff]
        %v1212 = vld [vmem:[#allocation9 + $0x10] sm:$0xff]
        %v1213 = vld [vmem:[#allocation9 + $0x18] sm:$0xff]
        %v1214 = vld [vmem:[%s4] sm:$0x1]
        %v1216 = vlaneseq
        %v1217 = vshrl.u32 %v1216, 7
        %v1218 = vsub.s32 0, %v1217
        %v1219 = vrot.slane %v1214, %v1218
        %1222 = vrot.lane.b32.xlu0 %v1209, 32
        %v1223 = vpop.permute.xlu0 %1222
        %v1224 = vsel %vm341, %v1223, 0
        %1226 = vmatprep.subr.mxu0 0.0
        %1227 = vmatpush1.msra.mxu0 0.0
        %1228 = vmatprep.subr.mxu0 0.0
        %1229 = vmatpush1.msra.mxu0 0.0
        %1230 = vmatprep.subr.mxu0 0.0
        %1231 = vmatpush1.msra.mxu0 0.0
        %1232 = vmatprep.subr.mxu0 0.0
        %1233 = vmatpush1.msra.mxu0 0.0
        %1234 = vmatprep.subr.mxu0 0.0
        %1235 = vmatpush1.msra.mxu0 0.0
        %1236 = vmatprep.subr.mxu0 0.0
        %1237 = vmatpush1.msra.mxu0 0.0
        %1238 = vmatprep.subr.mxu0 0.0
        %1239 = vmatpush1.msra.mxu0 0.0
        %1240 = vmatprep.subr.mxu0 0.0
        %1241 = vmatpush1.msra.mxu0 0.0
        %1242 = vmatprep.subr.mxu0 0.0
        %1243 = vmatpush1.msra.mxu0 0.0
        %1244 = vmatprep.subr.mxu0 0.0
        %1245 = vmatpush1.msra.mxu0 0.0
        %1246 = vmatprep.subr.mxu0 0.0
        %1247 = vmatpush1.msra.mxu0 0.0
        %1248 = vmatprep.subr.mxu0 0.0
        %1249 = vmatpush1.msra.mxu0 0.0
        %1250 = vmatprep.subr.mxu0 0.0
        %1251 = vmatpush1.msra.mxu0 %v1213
        %1252 = vmatprep.subr.mxu0 0.0
        %1253 = vmatpush1.msra.mxu0 %v1212
        %1254 = vmatprep.subr.mxu0 0.0
        %1255 = vmatpush1.msra.mxu0 %v1211
        %1256 = vmatprep.subr.mxu0 0.0
        %1257 = vmatpush1.msra.mxu0 %v1210
        %1258 = vmatprep.subr.mxu0 0.0
        %1259 = vmatpush2.msra.mxu0 0.0
        %1260 = vmatprep.subr.mxu0 0.0
        %1261 = vmatpush2.msra.mxu0 0.0
        %1262 = vmatprep.subr.mxu0 0.0
        %1263 = vmatpush2.msra.mxu0 0.0
        %1264 = vmatprep.subr.mxu0 0.0
        %1265 = vmatpush2.msra.mxu0 0.0
        %1266 = vmatprep.subr.mxu0 0.0
        %1267 = vmatpush2.msra.mxu0 0.0
        %1268 = vmatprep.subr.mxu0 0.0
        %1269 = vmatpush2.msra.mxu0 0.0
        %1270 = vmatprep.subr.mxu0 0.0
        %1271 = vmatpush2.msra.mxu0 0.0
        %1272 = vmatprep.subr.mxu0 0.0
        %1273 = vmatpush2.msra.mxu0 0.0
        %1274 = vmatprep.subr.mxu0 0.0
        %1275 = vmatpush2.msra.mxu0 0.0
        %1276 = vmatprep.subr.mxu0 0.0
        %1277 = vmatpush2.msra.mxu0 0.0
        %1278 = vmatprep.subr.mxu0 0.0
        %1279 = vmatpush2.msra.mxu0 0.0
        %1280 = vmatprep.subr.mxu0 0.0
        %1281 = vmatpush2.msra.mxu0 0.0
        %1282 = vmatprep.subr.mxu0 0.0
        %1283 = vmatpush2.msra.mxu0 0.0
        %1284 = vmatprep.subr.mxu0 0.0
        %1285 = vmatpush2.msra.mxu0 0.0
        %1286 = vmatprep.subr.mxu0 0.0
        %1287 = vmatpush2.msra.mxu0 0.0
        %1288 = vmatprep.subr.mxu0 0.0
        %1289 = vmatpush2.msra.mxu0 0.0
        %1290 = vmatprep.mubr.f32.mxu0 0.0
        %1291 = vmatmul.mubr.f32.gmra.mxu0 %v1224
        %v1292 = vpop.f32.mrf.mxu0
        %v1293 = vadd.f32 %v1219, %v1292
        %v1294 = vpop.f32.mrf.mxu0
        %1295 = vdwg.mxu0
        %1296 = vmax.xlane.f32.xlu0 %v1293
        %v1297 = vpop.xlane.xlu0 %1296
        %v1298 = vsub.f32 %v1293, %v1297
        %v1299 = vmul.f32 %v1298, 1.442695
        %v1300 = vpow.pop %v1299
        %1301 = vadd.xlane.f32.xlu0 %v1300
        %v1302 = vpop.xlane.xlu0 %1301
        %v1303 = vlog2.pop %v1302
        %v1304 = vmul.f32 %v1303, 0.6931472
        %v1305 = vsub.f32 %v1298, %v1304
        %1306 = vst [vmem:[%s184] sm:$0xff] %v1305
        %s1307 = sand.u32 %s96, 1
        %s1308 = scalar_lea.sflag [#allocation8], %s1307
        %s1309 = sand.u32 %s96, 1
        %s1310 = smul.addr %s1309, 8
        %s1311 = scalar_lea.vmem [#allocation11], %s1310
        // Predicated region
        $region73: #{tpu_custom_call.1} parent=31 // pred_check
          %p1312 = pneg %p106
        $region74: #{tpu_custom_call.1} parent=31 // pred_check_branch
          %1314 = sbr.rel (%p1312) target = $region76
        $region75: #{tpu_custom_call.1} parent=31 // pred_region
          %s1316 = ssub.s32 128, 128
          %1317 = vsyncadd %s1308, %s1316
          %s1318 = smul.addr %s25, 128
          %s1319 = scalar_lea.hbm %s5, %s1318
          %s1321 = sshll.u32 %s1311, 4
          %s1322 = int_to_ptr.vmem [resolvable:$true] %s1321
          %1324 = dma.vmem_to_hbm [thread:$0]  %s1322, 128, %s1319, %s1308
        $region76: #{tpu_custom_call.1} parent=31 // pred_fallthru
          _
      $region32: #{tpu_custom_call.1} parent=5 // pred_fallthru
        _
      %p1325 = scmp.le.s32.totalorder 2, %s20
      // Predicated region
      $region77: #{tpu_custom_call.1} parent=5 // pred_check
        %p1326 = pneg %p1325
      $region78: #{tpu_custom_call.1} parent=5 // pred_check_branch
        %1328 = sbr.rel (%p1326) target = $region80
      $region79: #{tpu_custom_call.1} parent=5 // pred_region
        %s1329 = ssub.s32 %s20, 2
        // Predicated region
        $region81: #{tpu_custom_call.1} parent=79 // pred_check
          %p1330 = pneg %p112
        $region82: #{tpu_custom_call.1} parent=79 // pred_check_branch
          %1332 = sbr.rel (%p1330) target = $region84
        $region83: #{tpu_custom_call.1} parent=79 // pred_region
          %s1333 = sand.u32 %s97, 1
          %s1334 = scalar_lea.sflag [#allocation8], %s1333
          %s1335 = sand.u32 %s97, 1
          %s1336 = smul.addr %s1335, 8
          %s1337 = scalar_lea.vmem [#allocation11], %s1336
          %1338 = dma.done %s1334, 128
        $region84: #{tpu_custom_call.1} parent=79 // pred_fallthru
          _
      $region80: #{tpu_custom_call.1} parent=5 // pred_fallthru
        _
    $region6: #{tpu_custom_call.1} parent=1 // loop_footer
      %s24 = sadd.s32 1, %s20
    $region7: #{tpu_custom_call.1} parent=1 // loop_footer_branch
      %19 = sbr.rel target = $region3
    $region8: #{tpu_custom_call.1} parent=1 // loop_exit
      _
    %1339 = vsyncpa [#allocation7], 1
    %s1340 = scalar_lea.sflag [#allocation7], 1
    %1341 = vsyncpa %s1340, 1
    %1342 = vsyncpa [#allocation10], 1
    %1343 = vsyncpa [#allocation8], 1
    %s1344 = scalar_lea.sflag [#allocation8], 1
    %1345 = vsyncpa %s1344, 1
  %1346 = vsyncmov [#allocation3]
  %s1347 = vpop.sfrf %1346
  %p1348 = scmp.eq.s32.totalorder %s1347, 0
  %p1349 = pneg %p1348
  %1351 = shalt.err (%p1349)
  %s1352 = scalar_lea.sflag [#allocation3], 1
  %1353 = vsyncmov %s1352
  %s1354 = vpop.sfrf %1353
  %p1355 = scmp.eq.s32.totalorder %s1354, 0
  %p1356 = pneg %p1355
  %1358 = shalt.err (%p1356)
  %s1359 = scalar_lea.sflag [#allocation3], 2
  %1360 = vsyncmov %s1359
  %s1361 = vpop.sfrf %1360
  %p1362 = scmp.eq.s32.totalorder %s1361, 0
  %p1363 = pneg %p1362
  %1365 = shalt.err (%p1363)
  %s1366 = scalar_lea.sflag [#allocation3], 3
  %1367 = vsyncmov %s1366
  %s1368 = vpop.sfrf %1367
  %p1369 = scmp.eq.s32.totalorder %s1368, 0
  %p1370 = pneg %p1369
  %1372 = shalt.err (%p1370)
  %s1373 = scalar_lea.sflag [#allocation3], 4
  %1374 = vsyncmov %s1373
  %s1375 = vpop.sfrf %1374
  %p1376 = scmp.eq.s32.totalorder %s1375, 0
  %p1377 = pneg %p1376
  %1379 = shalt.err (%p1377)
  %s1380 = scalar_lea.sflag [#allocation3], 5
  %1381 = vsyncmov %s1380
  %s1382 = vpop.sfrf %1381
  %p1383 = scmp.eq.s32.totalorder %s1382, 0
  %p1384 = pneg %p1383
  %1386 = shalt.err (%p1384)
  %s1387 = scalar_lea.sflag [#allocation3], 6
  %1388 = vsyncmov %s1387
  %s1389 = vpop.sfrf %1388
  %p1390 = scmp.eq.s32.totalorder %s1389, 0
  %p1391 = pneg %p1390
  %1393 = shalt.err (%p1391)
  %s1394 = scalar_lea.sflag [#allocation3], 7
  %1395 = vsyncmov %s1394
  %s1396 = vpop.sfrf %1395
  %p1397 = scmp.eq.s32.totalorder %s1396, 0
  %p1398 = pneg %p1397
  %1400 = shalt.err (%p1398)

</llo_original>
